<compile_context>
chip_gen: v7x
topology: tpu7x:2x2x1
jax: 0.10.0
libtpu: 0.0.40
codegen_flags: <defaults>
</compile_context>

<pallas_src>
import jax
import jax.numpy as jnp
from jax.experimental import pallas as pl
from jax.experimental.pallas import tpu as pltpu


# ----------------------------------------------------------------------------
# Config (synthetic, deterministic)
# ----------------------------------------------------------------------------
BASE_CH = [8, 16, 32, 64]        # backbone output channels per level
CONVERT_CH = [8, 8, 16, 16]      # ConvertLayer output channels per level
MERGE_CH = 8                     # merge feature width
N_SUB = 4                        # subitizing classes
N_LEVELS = len(BASE_CH)

_VMEM_LIMIT = 32 * 1024 * 1024   # generous; actual per-tile footprint ~few MB
_TARGET_TILE = 8192              # lanes per grid step (kernel is HBM-bound)


def _pick_tile(m, target=_TARGET_TILE):
    """Largest multiple of 128 that divides m and is <= target, else full m."""
    best = None
    t = 128
    while t <= min(m, target):
        if m % t == 0:
            best = t
        t += 128
    return best if best is not None else m


def _full_spec(a):
    """BlockSpec that loads an entire small array (weights / biases) once."""
    nd = a.ndim
    return pl.BlockSpec(a.shape, lambda i, t, _nd=nd: (0,) * _nd)


# ----------------------------------------------------------------------------
# The fused kernel: 4 level chains -> cross-level accumulate -> heads -> GAP
# ----------------------------------------------------------------------------
def _tun_fused_kernel(*refs):
    # refs layout (inputs first, then outputs):
    #   [0 : L]             per-level inputs        [3, tm]     bf16
    #   [L : L+6L]          per-level weights       (wb, bb, wc, bc, wm, bm)
    #   [L+6L : L+6L+6]     head weights            (wes, bes, wf, bf, w2, b2)
    #   [-2]                scores output           [3, tm]     f32
    #   [-1]                GAP accumulator output  [8, 1]      f32
    xs = refs[:N_LEVELS]
    lw = refs[N_LEVELS:N_LEVELS + 6 * N_LEVELS]
    wes, bes, wf, bff, w2, b2 = refs[N_LEVELS + 6 * N_LEVELS:
                                     N_LEVELS + 6 * N_LEVELS + 6]
    scores_ref, gap_ref = refs[-2], refs[-1]

    # --- per-level chains (base conv -> convert+BN -> [edge||sal]) + accumulate
    feat = None
    for lvl in range(N_LEVELS):
        wb, bb, wc, bc, wm, bm = lw[6 * lvl:6 * lvl + 6]
        h = jnp.dot(wb[...], xs[lvl][...], preferred_element_type=jnp.float32)
        h = jnp.maximum(h + bb[...], 0.0)                 # base conv + ReLU
        h = jnp.dot(wc[...], h.astype(jnp.bfloat16),
                    preferred_element_type=jnp.float32)
        h = jnp.maximum(h + bc[...], 0.0)                 # convert (BN folded) + ReLU
        h = jnp.dot(wm[...], h.astype(jnp.bfloat16),
                    preferred_element_type=jnp.float32)
        h = jnp.maximum(h + bm[...], 0.0)                 # [edge||sal] transforms + ReLU
        feat = h if feat is None else feat + h            # cross-level sum (f32)

    # --- heads on the resident [16, tm] feature
    featb = feat.astype(jnp.bfloat16)
    es = jnp.dot(wes[...], featb,
                 preferred_element_type=jnp.float32) + bes[...]        # [2, tm]
    fused = jnp.maximum(
        jnp.dot(wf[...], featb, preferred_element_type=jnp.float32) + bff[...],
        0.0)                                                           # merge2 fuse + ReLU
    fin = jnp.dot(w2[...], fused.astype(jnp.bfloat16),
                  preferred_element_type=jnp.float32) + b2[...]        # [1, tm]
    scores_ref[...] = jnp.concatenate([es, fin], axis=0).astype(scores_ref.dtype)

    # --- subitizing GAP: accumulate sum over the spatial grid axis
    @pl.when(pl.program_id(1) == 0)
    def _():
        gap_ref[...] = jnp.zeros_like(gap_ref)
    gap_ref[...] += jnp.sum(feat[MERGE_CH:, :], axis=1, keepdims=True)


def tun_fused(xs_flat, level_params, head_params):
    """xs_flat: list of 4 [N, 3, M] bf16 arrays (pooled inputs upsampled to M).
    Returns (scores [N,3,M] f32, gap_sum [N,8,1] f32)."""
    n, cin, m = xs_flat[0].shape
    tm = _pick_tile(m)
    grid = (n, m // tm)

    x_spec = pl.BlockSpec((None, cin, tm), lambda i, t: (i, 0, t))
    in_specs = ([x_spec] * N_LEVELS
                + [_full_spec(a) for a in level_params]
                + [_full_spec(a) for a in head_params])
    out_specs = (
        pl.BlockSpec((None, 3, tm), lambda i, t: (i, 0, t)),
        pl.BlockSpec((None, MERGE_CH, 1), lambda i, t: (i, 0, 0)),   # accumulator
    )
    return pl.pallas_call(
        _tun_fused_kernel,
        out_shape=(jax.ShapeDtypeStruct((n, 3, m), jnp.float32),
                   jax.ShapeDtypeStruct((n, MERGE_CH, 1), jnp.float32)),
        grid_spec=pltpu.PrefetchScalarGridSpec(
            num_scalar_prefetch=0,
            grid=grid,
            in_specs=in_specs,
            out_specs=out_specs),
        compiler_params=pltpu.CompilerParams(
            dimension_semantics=("parallel", "arbitrary"),
            vmem_limit_bytes=_VMEM_LIMIT),
    )(*xs_flat, *level_params, *head_params)


# ----------------------------------------------------------------------------
# Plain-JAX glue
# ----------------------------------------------------------------------------
def avg_pool_nchw(x, factor):
    if factor == 1:
        return x
    n, c, h, w = x.shape
    return x.reshape(n, c, h // factor, factor, w // factor, factor).mean(axis=(3, 5))


def upsample_nearest_nchw(x, out_hw):
    n, c, h, w = x.shape
    if (h, w) == tuple(out_hw):
        return x
    fh, fw = out_hw[0] // h, out_hw[1] // w
    x = jnp.repeat(x, fh, axis=2)
    x = jnp.repeat(x, fw, axis=3)
    return x


def fold_bn(gamma, beta, running_mean, running_var, eps=1e-5):
    scale = gamma / jnp.sqrt(running_var + eps)
    shift = beta - running_mean * scale
    return scale, shift


# ----------------------------------------------------------------------------
# Parameters (deterministic, synthetic).  All conv weights are channel-major
# [Cout, Cin] so no transposes are needed at trace time.
# ----------------------------------------------------------------------------
def build_params(key):
    p = {}
    keys = iter(jax.random.split(key, 64))

    def nrm(shape):
        return 0.1 * jax.random.normal(next(keys), shape, jnp.float32)

    # base backbone: per level a 1x1 conv (3 -> BASE_CH[l]) with bias + ReLU
    p["base_w"] = [nrm((c, 3)) for c in BASE_CH]
    p["base_b"] = [nrm((c,)) for c in BASE_CH]

    # ConvertLayer: Conv2d(BASE_CH[l]->CONVERT_CH[l], 1x1, bias=False) + BN + ReLU
    p["cvt_w"] = [nrm((co, ci)) for ci, co in zip(BASE_CH, CONVERT_CH)]
    p["cvt_bn"] = []
    for co in CONVERT_CH:
        gamma = 1.0 + 0.01 * jax.random.normal(next(keys), (co,), jnp.float32)
        beta = 0.01 * jax.random.normal(next(keys), (co,), jnp.float32)
        mean = jnp.zeros((co,), jnp.float32)
        var = jnp.ones((co,), jnp.float32)
        p["cvt_bn"].append((gamma, beta, mean, var))

    # merge1: per-level edge / sal transforms, score convs, subitizing head
    p["m1_edge_w"] = [nrm((MERGE_CH, c)) for c in CONVERT_CH]
    p["m1_edge_b"] = [nrm((MERGE_CH,)) for _ in CONVERT_CH]
    p["m1_sal_w"] = [nrm((MERGE_CH, c)) for c in CONVERT_CH]
    p["m1_sal_b"] = [nrm((MERGE_CH,)) for _ in CONVERT_CH]
    p["m1_edge_score_w"] = nrm((1, MERGE_CH))
    p["m1_edge_score_b"] = nrm((1,))
    p["m1_sal_score_w"] = nrm((1, MERGE_CH))
    p["m1_sal_score_b"] = nrm((1,))
    p["m1_sub_w"] = nrm((MERGE_CH, N_SUB))
    p["m1_sub_b"] = nrm((N_SUB,))

    # merge2: fuse edge+sal features (2*MERGE_CH -> MERGE_CH) + ReLU, then score
    p["m2_fuse_w"] = nrm((MERGE_CH, 2 * MERGE_CH))
    p["m2_fuse_b"] = nrm((MERGE_CH,))
    p["m2_score_w"] = nrm((1, MERGE_CH))
    p["m2_score_b"] = nrm((1,))
    return p


# ----------------------------------------------------------------------------
# TUN_bone forward (resnext101 branch: base -> convert -> merge1 -> merge2)
# ----------------------------------------------------------------------------
def tun_bone_forward(p, x):
    n, cin, h, w = x.shape
    x_size = (h, w)
    m = h * w

    # ---- multi-scale pooled inputs, nearest-upsampled back to full res (bf16)
    # (pointwise chains commute with nearest upsample, so running the chains at
    #  full resolution is mathematically identical to coarse-chain + upsample.)
    xs_flat = []
    xl = x
    for lvl in range(N_LEVELS):
        if lvl > 0:
            xl = avg_pool_nchw(xl, 2)
        up = upsample_nearest_nchw(xl.astype(jnp.bfloat16), (h, w))
        xs_flat.append(up.reshape(n, cin, m))

    # ---- trace-time weight prep: fold BN scale into convert weights, stack
    #      the edge/sal transforms, pre-cast to bf16, biases f32 [C,1].
    level_params = []
    for lvl in range(N_LEVELS):
        scale, shift = fold_bn(*p["cvt_bn"][lvl])
        wb = p["base_w"][lvl].astype(jnp.bfloat16)
        bb = p["base_b"][lvl].reshape(-1, 1)
        wc = (scale[:, None] * p["cvt_w"][lvl]).astype(jnp.bfloat16)
        bc = shift.reshape(-1, 1)
        wm = jnp.concatenate([p["m1_edge_w"][lvl], p["m1_sal_w"][lvl]],
                             axis=0).astype(jnp.bfloat16)
        bm = jnp.concatenate([p["m1_edge_b"][lvl], p["m1_sal_b"][lvl]],
                             axis=0).reshape(-1, 1)
        level_params += [wb, bb, wc, bc, wm, bm]

    zeros8 = jnp.zeros((1, MERGE_CH), jnp.float32)
    wes = jnp.concatenate(
        [jnp.concatenate([p["m1_edge_score_w"], zeros8], axis=1),
         jnp.concatenate([zeros8, p["m1_sal_score_w"]], axis=1)],
        axis=0).astype(jnp.bfloat16)                                   # [2, 16]
    bes = jnp.concatenate([p["m1_edge_score_b"],
                           p["m1_sal_score_b"]]).reshape(2, 1)
    wf = p["m2_fuse_w"].astype(jnp.bfloat16)
    bf = p["m2_fuse_b"].reshape(-1, 1)
    w2 = p["m2_score_w"].astype(jnp.bfloat16)
    b2 = p["m2_score_b"].reshape(1, 1)
    head_params = [wes, bes, wf, bf, w2, b2]

    # ---- single fused kernel: chains + accumulate + heads + GAP ----
    scores, gap_sum = tun_fused(xs_flat, level_params, head_params)

    up_edge = upsample_nearest_nchw(scores[:, 0:1].reshape(n, 1, h, w), x_size)
    up_sal = upsample_nearest_nchw(scores[:, 1:2].reshape(n, 1, h, w), x_size)
    up_sal_final = upsample_nearest_nchw(scores[:, 2:3].reshape(n, 1, h, w), x_size)

    # ---- subitizing head: GAP (computed in-kernel) + tiny [8x4] linear ----
    gap = gap_sum[:, :, 0] / float(m)                                  # [N, 8]
    up_subitizing = gap @ p["m1_sub_w"] + p["m1_sub_b"]                # [N, 4]

    return up_edge, up_sal, up_subitizing, up_sal_final


# ----------------------------------------------------------------------------
if __name__ == "__main__":
    key = jax.random.PRNGKey(0)
    pkey, xkey = jax.random.split(key)
    params = build_params(pkey)

    # NCHW input (PyTorch convention): batch=2, channels=3, spatial=16x16
    x = jax.random.normal(xkey, (2, 3, 16, 16), jnp.float32)

    fwd = jax.jit(lambda xx: tun_bone_forward(params, xx))
    up_edge, up_sal, up_subitizing, up_sal_final = fwd(x)
    jax.block_until_ready((up_edge, up_sal, up_subitizing, up_sal_final))

    assert up_edge.shape == (2, 1, 16, 16)
    assert up_sal.shape == (2, 1, 16, 16)
    assert up_subitizing.shape == (2, N_SUB)
    assert up_sal_final.shape == (2, 1, 16, 16)
    print("KERNEL_OK")
</pallas_src>

<mosaic_0001>
module attributes {stable_mosaic.version = 11 : i64} {
  func.func @_tun_fused_kernel(%arg0: i32, %arg1: i32, %arg2: memref<1x3x256xbf16, #tpu.memory_space<vmem>>, %arg3: memref<1x3x256xbf16, #tpu.memory_space<vmem>>, %arg4: memref<1x3x256xbf16, #tpu.memory_space<vmem>>, %arg5: memref<1x3x256xbf16, #tpu.memory_space<vmem>>, %arg6: memref<8x3xbf16, #tpu.memory_space<vmem>>, %arg7: memref<8x1xf32, #tpu.memory_space<vmem>>, %arg8: memref<8x8xbf16, #tpu.memory_space<vmem>>, %arg9: memref<8x1xf32, #tpu.memory_space<vmem>>, %arg10: memref<16x8xbf16, #tpu.memory_space<vmem>>, %arg11: memref<16x1xf32, #tpu.memory_space<vmem>>, %arg12: memref<16x3xbf16, #tpu.memory_space<vmem>>, %arg13: memref<16x1xf32, #tpu.memory_space<vmem>>, %arg14: memref<8x16xbf16, #tpu.memory_space<vmem>>, %arg15: memref<8x1xf32, #tpu.memory_space<vmem>>, %arg16: memref<16x8xbf16, #tpu.memory_space<vmem>>, %arg17: memref<16x1xf32, #tpu.memory_space<vmem>>, %arg18: memref<32x3xbf16, #tpu.memory_space<vmem>>, %arg19: memref<32x1xf32, #tpu.memory_space<vmem>>, %arg20: memref<16x32xbf16, #tpu.memory_space<vmem>>, %arg21: memref<16x1xf32, #tpu.memory_space<vmem>>, %arg22: memref<16x16xbf16, #tpu.memory_space<vmem>>, %arg23: memref<16x1xf32, #tpu.memory_space<vmem>>, %arg24: memref<64x3xbf16, #tpu.memory_space<vmem>>, %arg25: memref<64x1xf32, #tpu.memory_space<vmem>>, %arg26: memref<16x64xbf16, #tpu.memory_space<vmem>>, %arg27: memref<16x1xf32, #tpu.memory_space<vmem>>, %arg28: memref<16x16xbf16, #tpu.memory_space<vmem>>, %arg29: memref<16x1xf32, #tpu.memory_space<vmem>>, %arg30: memref<2x16xbf16, #tpu.memory_space<vmem>>, %arg31: memref<2x1xf32, #tpu.memory_space<vmem>>, %arg32: memref<8x16xbf16, #tpu.memory_space<vmem>>, %arg33: memref<8x1xf32, #tpu.memory_space<vmem>>, %arg34: memref<1x8xbf16, #tpu.memory_space<vmem>>, %arg35: memref<1x1xf32, #tpu.memory_space<vmem>>, %arg36: memref<1x3x256xf32, #tpu.memory_space<vmem>>, %arg37: memref<1x8x1xf32, #tpu.memory_space<vmem>>) attributes {dimension_semantics = [#tpu.dimension_semantics<parallel>, #tpu.dimension_semantics<arbitrary>], iteration_bounds = array<i64: 2, 1>, scalar_prefetch = 0 : i64, scratch_operands = 0 : i64, tpu.core_type = #tpu.core_type<tc>, window_params = [{transform_indices = @transform_0, window_bounds = array<i64: 1, 3, 256>}, {transform_indices = @transform_1, window_bounds = array<i64: 1, 3, 256>}, {transform_indices = @transform_2, window_bounds = array<i64: 1, 3, 256>}, {transform_indices = @transform_3, window_bounds = array<i64: 1, 3, 256>}, {pipeline_mode = #tpu.pipeline_mode<synchronous>, transform_indices = @transform_4, window_bounds = array<i64: 8, 3>}, {pipeline_mode = #tpu.pipeline_mode<synchronous>, transform_indices = @transform_5, window_bounds = array<i64: 8, 1>}, {pipeline_mode = #tpu.pipeline_mode<synchronous>, transform_indices = @transform_6, window_bounds = array<i64: 8, 8>}, {pipeline_mode = #tpu.pipeline_mode<synchronous>, transform_indices = @transform_7, window_bounds = array<i64: 8, 1>}, {pipeline_mode = #tpu.pipeline_mode<synchronous>, transform_indices = @transform_8, window_bounds = array<i64: 16, 8>}, {pipeline_mode = #tpu.pipeline_mode<synchronous>, transform_indices = @transform_9, window_bounds = array<i64: 16, 1>}, {pipeline_mode = #tpu.pipeline_mode<synchronous>, transform_indices = @transform_10, window_bounds = array<i64: 16, 3>}, {pipeline_mode = #tpu.pipeline_mode<synchronous>, transform_indices = @transform_11, window_bounds = array<i64: 16, 1>}, {pipeline_mode = #tpu.pipeline_mode<synchronous>, transform_indices = @transform_12, window_bounds = array<i64: 8, 16>}, {pipeline_mode = #tpu.pipeline_mode<synchronous>, transform_indices = @transform_13, window_bounds = array<i64: 8, 1>}, {pipeline_mode = #tpu.pipeline_mode<synchronous>, transform_indices = @transform_14, window_bounds = array<i64: 16, 8>}, {pipeline_mode = #tpu.pipeline_mode<synchronous>, transform_indices = @transform_15, window_bounds = array<i64: 16, 1>}, {pipeline_mode = #tpu.pipeline_mode<synchronous>, transform_indices = @transform_16, window_bounds = array<i64: 32, 3>}, {pipeline_mode = #tpu.pipeline_mode<synchronous>, transform_indices = @transform_17, window_bounds = array<i64: 32, 1>}, {pipeline_mode = #tpu.pipeline_mode<synchronous>, transform_indices = @transform_18, window_bounds = array<i64: 16, 32>}, {pipeline_mode = #tpu.pipeline_mode<synchronous>, transform_indices = @transform_19, window_bounds = array<i64: 16, 1>}, {pipeline_mode = #tpu.pipeline_mode<synchronous>, transform_indices = @transform_20, window_bounds = array<i64: 16, 16>}, {pipeline_mode = #tpu.pipeline_mode<synchronous>, transform_indices = @transform_21, window_bounds = array<i64: 16, 1>}, {pipeline_mode = #tpu.pipeline_mode<synchronous>, transform_indices = @transform_22, window_bounds = array<i64: 64, 3>}, {pipeline_mode = #tpu.pipeline_mode<synchronous>, transform_indices = @transform_23, window_bounds = array<i64: 64, 1>}, {pipeline_mode = #tpu.pipeline_mode<synchronous>, transform_indices = @transform_24, window_bounds = array<i64: 16, 64>}, {pipeline_mode = #tpu.pipeline_mode<synchronous>, transform_indices = @transform_25, window_bounds = array<i64: 16, 1>}, {pipeline_mode = #tpu.pipeline_mode<synchronous>, transform_indices = @transform_26, window_bounds = array<i64: 16, 16>}, {pipeline_mode = #tpu.pipeline_mode<synchronous>, transform_indices = @transform_27, window_bounds = array<i64: 16, 1>}, {pipeline_mode = #tpu.pipeline_mode<synchronous>, transform_indices = @transform_28, window_bounds = array<i64: 2, 16>}, {pipeline_mode = #tpu.pipeline_mode<synchronous>, transform_indices = @transform_29, window_bounds = array<i64: 2, 1>}, {pipeline_mode = #tpu.pipeline_mode<synchronous>, transform_indices = @transform_30, window_bounds = array<i64: 8, 16>}, {pipeline_mode = #tpu.pipeline_mode<synchronous>, transform_indices = @transform_31, window_bounds = array<i64: 8, 1>}, {pipeline_mode = #tpu.pipeline_mode<synchronous>, transform_indices = @transform_32, window_bounds = array<i64: 1, 8>}, {pipeline_mode = #tpu.pipeline_mode<synchronous>, transform_indices = @transform_33, window_bounds = array<i64: 1, 1>}, {transform_indices = @transform_34, window_bounds = array<i64: 1, 3, 256>}, {transform_indices = @transform_35, window_bounds = array<i64: 1, 8, 1>}]} {
    %c0 = arith.constant 0 : index
    %c0_0 = arith.constant 0 : index
    %0 = vector.load %arg6[%c0, %c0_0] : memref<8x3xbf16, #tpu.memory_space<vmem>>, vector<8x3xbf16>
    %c0_1 = arith.constant 0 : index
    %c0_2 = arith.constant 0 : index
    %c0_3 = arith.constant 0 : index
    %1 = vector.load %arg2[%c0_1, %c0_2, %c0_3] : memref<1x3x256xbf16, #tpu.memory_space<vmem>>, vector<1x3x256xbf16>
    %2 = vector.shape_cast %1 : vector<1x3x256xbf16> to vector<3x256xbf16>
    %cst = arith.constant dense<0.000000e+00> : vector<8x256xf32>
    %3 = tpu.matmul %0, %2, %cst {dimension_numbers = #tpu.dot_dimension_numbers<[1], [0], [0], [1], [0, 0, 1, 1], [], []>} : vector<8x3xbf16>, vector<3x256xbf16>, vector<8x256xf32> -> vector<8x256xf32>
    %c0_4 = arith.constant 0 : index
    %c0_5 = arith.constant 0 : index
    %4 = vector.load %arg7[%c0_4, %c0_5] : memref<8x1xf32, #tpu.memory_space<vmem>>, vector<8x1xf32>
    %5 = vector.broadcast %4 : vector<8x1xf32> to vector<8x256xf32>
    %6 = arith.addf %3, %5 : vector<8x256xf32>
    %cst_6 = arith.constant 0.000000e+00 : f32
    %7 = vector.broadcast %cst_6 : f32 to vector<8x256xf32>
    %8 = arith.maximumf %6, %7 : vector<8x256xf32>
    %c0_7 = arith.constant 0 : index
    %c0_8 = arith.constant 0 : index
    %9 = vector.load %arg8[%c0_7, %c0_8] : memref<8x8xbf16, #tpu.memory_space<vmem>>, vector<8x8xbf16>
    %10 = arith.truncf %8 : vector<8x256xf32> to vector<8x256xbf16>
    %cst_9 = arith.constant dense<0.000000e+00> : vector<8x256xf32>
    %11 = tpu.matmul %9, %10, %cst_9 {dimension_numbers = #tpu.dot_dimension_numbers<[1], [0], [0], [1], [0, 0, 1, 1], [], []>} : vector<8x8xbf16>, vector<8x256xbf16>, vector<8x256xf32> -> vector<8x256xf32>
    %c0_10 = arith.constant 0 : index
    %c0_11 = arith.constant 0 : index
    %12 = vector.load %arg9[%c0_10, %c0_11] : memref<8x1xf32, #tpu.memory_space<vmem>>, vector<8x1xf32>
    %13 = vector.broadcast %12 : vector<8x1xf32> to vector<8x256xf32>
    %14 = arith.addf %11, %13 : vector<8x256xf32>
    %cst_12 = arith.constant 0.000000e+00 : f32
    %15 = vector.broadcast %cst_12 : f32 to vector<8x256xf32>
    %16 = arith.maximumf %14, %15 : vector<8x256xf32>
    %c0_13 = arith.constant 0 : index
    %c0_14 = arith.constant 0 : index
    %17 = vector.load %arg10[%c0_13, %c0_14] : memref<16x8xbf16, #tpu.memory_space<vmem>>, vector<16x8xbf16>
    %18 = arith.truncf %16 : vector<8x256xf32> to vector<8x256xbf16>
    %cst_15 = arith.constant dense<0.000000e+00> : vector<16x256xf32>
    %19 = tpu.matmul %17, %18, %cst_15 {dimension_numbers = #tpu.dot_dimension_numbers<[1], [0], [0], [1], [0, 0, 1, 1], [], []>} : vector<16x8xbf16>, vector<8x256xbf16>, vector<16x256xf32> -> vector<16x256xf32>
    %c0_16 = arith.constant 0 : index
    %c0_17 = arith.constant 0 : index
    %20 = vector.load %arg11[%c0_16, %c0_17] : memref<16x1xf32, #tpu.memory_space<vmem>>, vector<16x1xf32>
    %21 = vector.broadcast %20 : vector<16x1xf32> to vector<16x256xf32>
    %22 = arith.addf %19, %21 : vector<16x256xf32>
    %cst_18 = arith.constant 0.000000e+00 : f32
    %23 = vector.broadcast %cst_18 : f32 to vector<16x256xf32>
    %24 = arith.maximumf %22, %23 : vector<16x256xf32>
    %c0_19 = arith.constant 0 : index
    %c0_20 = arith.constant 0 : index
    %25 = vector.load %arg12[%c0_19, %c0_20] : memref<16x3xbf16, #tpu.memory_space<vmem>>, vector<16x3xbf16>
    %c0_21 = arith.constant 0 : index
    %c0_22 = arith.constant 0 : index
    %c0_23 = arith.constant 0 : index
    %26 = vector.load %arg3[%c0_21, %c0_22, %c0_23] : memref<1x3x256xbf16, #tpu.memory_space<vmem>>, vector<1x3x256xbf16>
    %27 = vector.shape_cast %26 : vector<1x3x256xbf16> to vector<3x256xbf16>
    %cst_24 = arith.constant dense<0.000000e+00> : vector<16x256xf32>
    %28 = tpu.matmul %25, %27, %cst_24 {dimension_numbers = #tpu.dot_dimension_numbers<[1], [0], [0], [1], [0, 0, 1, 1], [], []>} : vector<16x3xbf16>, vector<3x256xbf16>, vector<16x256xf32> -> vector<16x256xf32>
    %c0_25 = arith.constant 0 : index
    %c0_26 = arith.constant 0 : index
    %29 = vector.load %arg13[%c0_25, %c0_26] : memref<16x1xf32, #tpu.memory_space<vmem>>, vector<16x1xf32>
    %30 = vector.broadcast %29 : vector<16x1xf32> to vector<16x256xf32>
    %31 = arith.addf %28, %30 : vector<16x256xf32>
    %cst_27 = arith.constant 0.000000e+00 : f32
    %32 = vector.broadcast %cst_27 : f32 to vector<16x256xf32>
    %33 = arith.maximumf %31, %32 : vector<16x256xf32>
    %c0_28 = arith.constant 0 : index
    %c0_29 = arith.constant 0 : index
    %34 = vector.load %arg14[%c0_28, %c0_29] : memref<8x16xbf16, #tpu.memory_space<vmem>>, vector<8x16xbf16>
    %35 = arith.truncf %33 : vector<16x256xf32> to vector<16x256xbf16>
    %cst_30 = arith.constant dense<0.000000e+00> : vector<8x256xf32>
    %36 = tpu.matmul %34, %35, %cst_30 {dimension_numbers = #tpu.dot_dimension_numbers<[1], [0], [0], [1], [0, 0, 1, 1], [], []>} : vector<8x16xbf16>, vector<16x256xbf16>, vector<8x256xf32> -> vector<8x256xf32>
    %c0_31 = arith.constant 0 : index
    %c0_32 = arith.constant 0 : index
    %37 = vector.load %arg15[%c0_31, %c0_32] : memref<8x1xf32, #tpu.memory_space<vmem>>, vector<8x1xf32>
    %38 = vector.broadcast %37 : vector<8x1xf32> to vector<8x256xf32>
    %39 = arith.addf %36, %38 : vector<8x256xf32>
    %cst_33 = arith.constant 0.000000e+00 : f32
    %40 = vector.broadcast %cst_33 : f32 to vector<8x256xf32>
    %41 = arith.maximumf %39, %40 : vector<8x256xf32>
    %c0_34 = arith.constant 0 : index
    %c0_35 = arith.constant 0 : index
    %42 = vector.load %arg16[%c0_34, %c0_35] : memref<16x8xbf16, #tpu.memory_space<vmem>>, vector<16x8xbf16>
    %43 = arith.truncf %41 : vector<8x256xf32> to vector<8x256xbf16>
    %cst_36 = arith.constant dense<0.000000e+00> : vector<16x256xf32>
    %44 = tpu.matmul %42, %43, %cst_36 {dimension_numbers = #tpu.dot_dimension_numbers<[1], [0], [0], [1], [0, 0, 1, 1], [], []>} : vector<16x8xbf16>, vector<8x256xbf16>, vector<16x256xf32> -> vector<16x256xf32>
    %c0_37 = arith.constant 0 : index
    %c0_38 = arith.constant 0 : index
    %45 = vector.load %arg17[%c0_37, %c0_38] : memref<16x1xf32, #tpu.memory_space<vmem>>, vector<16x1xf32>
    %46 = vector.broadcast %45 : vector<16x1xf32> to vector<16x256xf32>
    %47 = arith.addf %44, %46 : vector<16x256xf32>
    %cst_39 = arith.constant 0.000000e+00 : f32
    %48 = vector.broadcast %cst_39 : f32 to vector<16x256xf32>
    %49 = arith.maximumf %47, %48 : vector<16x256xf32>
    %50 = arith.addf %24, %49 : vector<16x256xf32>
    %c0_40 = arith.constant 0 : index
    %c0_41 = arith.constant 0 : index
    %51 = vector.load %arg18[%c0_40, %c0_41] : memref<32x3xbf16, #tpu.memory_space<vmem>>, vector<32x3xbf16>
    %c0_42 = arith.constant 0 : index
    %c0_43 = arith.constant 0 : index
    %c0_44 = arith.constant 0 : index
    %52 = vector.load %arg4[%c0_42, %c0_43, %c0_44] : memref<1x3x256xbf16, #tpu.memory_space<vmem>>, vector<1x3x256xbf16>
    %53 = vector.shape_cast %52 : vector<1x3x256xbf16> to vector<3x256xbf16>
    %cst_45 = arith.constant dense<0.000000e+00> : vector<32x256xf32>
    %54 = tpu.matmul %51, %53, %cst_45 {dimension_numbers = #tpu.dot_dimension_numbers<[1], [0], [0], [1], [0, 0, 1, 1], [], []>} : vector<32x3xbf16>, vector<3x256xbf16>, vector<32x256xf32> -> vector<32x256xf32>
    %c0_46 = arith.constant 0 : index
    %c0_47 = arith.constant 0 : index
    %55 = vector.load %arg19[%c0_46, %c0_47] : memref<32x1xf32, #tpu.memory_space<vmem>>, vector<32x1xf32>
    %56 = vector.broadcast %55 : vector<32x1xf32> to vector<32x256xf32>
    %57 = arith.addf %54, %56 : vector<32x256xf32>
    %cst_48 = arith.constant 0.000000e+00 : f32
    %58 = vector.broadcast %cst_48 : f32 to vector<32x256xf32>
    %59 = arith.maximumf %57, %58 : vector<32x256xf32>
    %c0_49 = arith.constant 0 : index
    %c0_50 = arith.constant 0 : index
    %60 = vector.load %arg20[%c0_49, %c0_50] : memref<16x32xbf16, #tpu.memory_space<vmem>>, vector<16x32xbf16>
    %61 = arith.truncf %59 : vector<32x256xf32> to vector<32x256xbf16>
    %cst_51 = arith.constant dense<0.000000e+00> : vector<16x256xf32>
    %62 = tpu.matmul %60, %61, %cst_51 {dimension_numbers = #tpu.dot_dimension_numbers<[1], [0], [0], [1], [0, 0, 1, 1], [], []>} : vector<16x32xbf16>, vector<32x256xbf16>, vector<16x256xf32> -> vector<16x256xf32>
    %c0_52 = arith.constant 0 : index
    %c0_53 = arith.constant 0 : index
    %63 = vector.load %arg21[%c0_52, %c0_53] : memref<16x1xf32, #tpu.memory_space<vmem>>, vector<16x1xf32>
    %64 = vector.broadcast %63 : vector<16x1xf32> to vector<16x256xf32>
    %65 = arith.addf %62, %64 : vector<16x256xf32>
    %cst_54 = arith.constant 0.000000e+00 : f32
    %66 = vector.broadcast %cst_54 : f32 to vector<16x256xf32>
    %67 = arith.maximumf %65, %66 : vector<16x256xf32>
    %c0_55 = arith.constant 0 : index
    %c0_56 = arith.constant 0 : index
    %68 = vector.load %arg22[%c0_55, %c0_56] : memref<16x16xbf16, #tpu.memory_space<vmem>>, vector<16x16xbf16>
    %69 = arith.truncf %67 : vector<16x256xf32> to vector<16x256xbf16>
    %cst_57 = arith.constant dense<0.000000e+00> : vector<16x256xf32>
    %70 = tpu.matmul %68, %69, %cst_57 {dimension_numbers = #tpu.dot_dimension_numbers<[1], [0], [0], [1], [0, 0, 1, 1], [], []>} : vector<16x16xbf16>, vector<16x256xbf16>, vector<16x256xf32> -> vector<16x256xf32>
    %c0_58 = arith.constant 0 : index
    %c0_59 = arith.constant 0 : index
    %71 = vector.load %arg23[%c0_58, %c0_59] : memref<16x1xf32, #tpu.memory_space<vmem>>, vector<16x1xf32>
    %72 = vector.broadcast %71 : vector<16x1xf32> to vector<16x256xf32>
    %73 = arith.addf %70, %72 : vector<16x256xf32>
    %cst_60 = arith.constant 0.000000e+00 : f32
    %74 = vector.broadcast %cst_60 : f32 to vector<16x256xf32>
    %75 = arith.maximumf %73, %74 : vector<16x256xf32>
    %76 = arith.addf %50, %75 : vector<16x256xf32>
    %c0_61 = arith.constant 0 : index
    %c0_62 = arith.constant 0 : index
    %77 = vector.load %arg24[%c0_61, %c0_62] : memref<64x3xbf16, #tpu.memory_space<vmem>>, vector<64x3xbf16>
    %c0_63 = arith.constant 0 : index
    %c0_64 = arith.constant 0 : index
    %c0_65 = arith.constant 0 : index
    %78 = vector.load %arg5[%c0_63, %c0_64, %c0_65] : memref<1x3x256xbf16, #tpu.memory_space<vmem>>, vector<1x3x256xbf16>
    %79 = vector.shape_cast %78 : vector<1x3x256xbf16> to vector<3x256xbf16>
    %cst_66 = arith.constant dense<0.000000e+00> : vector<64x256xf32>
    %80 = tpu.matmul %77, %79, %cst_66 {dimension_numbers = #tpu.dot_dimension_numbers<[1], [0], [0], [1], [0, 0, 1, 1], [], []>} : vector<64x3xbf16>, vector<3x256xbf16>, vector<64x256xf32> -> vector<64x256xf32>
    %c0_67 = arith.constant 0 : index
    %c0_68 = arith.constant 0 : index
    %81 = vector.load %arg25[%c0_67, %c0_68] : memref<64x1xf32, #tpu.memory_space<vmem>>, vector<64x1xf32>
    %82 = vector.broadcast %81 : vector<64x1xf32> to vector<64x256xf32>
    %83 = arith.addf %80, %82 : vector<64x256xf32>
    %cst_69 = arith.constant 0.000000e+00 : f32
    %84 = vector.broadcast %cst_69 : f32 to vector<64x256xf32>
    %85 = arith.maximumf %83, %84 : vector<64x256xf32>
    %c0_70 = arith.constant 0 : index
    %c0_71 = arith.constant 0 : index
    %86 = vector.load %arg26[%c0_70, %c0_71] : memref<16x64xbf16, #tpu.memory_space<vmem>>, vector<16x64xbf16>
    %87 = arith.truncf %85 : vector<64x256xf32> to vector<64x256xbf16>
    %cst_72 = arith.constant dense<0.000000e+00> : vector<16x256xf32>
    %88 = tpu.matmul %86, %87, %cst_72 {dimension_numbers = #tpu.dot_dimension_numbers<[1], [0], [0], [1], [0, 0, 1, 1], [], []>} : vector<16x64xbf16>, vector<64x256xbf16>, vector<16x256xf32> -> vector<16x256xf32>
    %c0_73 = arith.constant 0 : index
    %c0_74 = arith.constant 0 : index
    %89 = vector.load %arg27[%c0_73, %c0_74] : memref<16x1xf32, #tpu.memory_space<vmem>>, vector<16x1xf32>
    %90 = vector.broadcast %89 : vector<16x1xf32> to vector<16x256xf32>
    %91 = arith.addf %88, %90 : vector<16x256xf32>
    %cst_75 = arith.constant 0.000000e+00 : f32
    %92 = vector.broadcast %cst_75 : f32 to vector<16x256xf32>
    %93 = arith.maximumf %91, %92 : vector<16x256xf32>
    %c0_76 = arith.constant 0 : index
    %c0_77 = arith.constant 0 : index
    %94 = vector.load %arg28[%c0_76, %c0_77] : memref<16x16xbf16, #tpu.memory_space<vmem>>, vector<16x16xbf16>
    %95 = arith.truncf %93 : vector<16x256xf32> to vector<16x256xbf16>
    %cst_78 = arith.constant dense<0.000000e+00> : vector<16x256xf32>
    %96 = tpu.matmul %94, %95, %cst_78 {dimension_numbers = #tpu.dot_dimension_numbers<[1], [0], [0], [1], [0, 0, 1, 1], [], []>} : vector<16x16xbf16>, vector<16x256xbf16>, vector<16x256xf32> -> vector<16x256xf32>
    %c0_79 = arith.constant 0 : index
    %c0_80 = arith.constant 0 : index
    %97 = vector.load %arg29[%c0_79, %c0_80] : memref<16x1xf32, #tpu.memory_space<vmem>>, vector<16x1xf32>
    %98 = vector.broadcast %97 : vector<16x1xf32> to vector<16x256xf32>
    %99 = arith.addf %96, %98 : vector<16x256xf32>
    %cst_81 = arith.constant 0.000000e+00 : f32
    %100 = vector.broadcast %cst_81 : f32 to vector<16x256xf32>
    %101 = arith.maximumf %99, %100 : vector<16x256xf32>
    %102 = arith.addf %76, %101 : vector<16x256xf32>
    %103 = arith.truncf %102 : vector<16x256xf32> to vector<16x256xbf16>
    %c0_82 = arith.constant 0 : index
    %c0_83 = arith.constant 0 : index
    %104 = vector.load %arg30[%c0_82, %c0_83] : memref<2x16xbf16, #tpu.memory_space<vmem>>, vector<2x16xbf16>
    %cst_84 = arith.constant dense<0.000000e+00> : vector<2x256xf32>
    %105 = tpu.matmul %104, %103, %cst_84 {dimension_numbers = #tpu.dot_dimension_numbers<[1], [0], [0], [1], [0, 0, 1, 1], [], []>} : vector<2x16xbf16>, vector<16x256xbf16>, vector<2x256xf32> -> vector<2x256xf32>
    %c0_85 = arith.constant 0 : index
    %c0_86 = arith.constant 0 : index
    %106 = vector.load %arg31[%c0_85, %c0_86] : memref<2x1xf32, #tpu.memory_space<vmem>>, vector<2x1xf32>
    %107 = vector.broadcast %106 : vector<2x1xf32> to vector<2x256xf32>
    %108 = arith.addf %105, %107 : vector<2x256xf32>
    %c0_87 = arith.constant 0 : index
    %c0_88 = arith.constant 0 : index
    %109 = vector.load %arg32[%c0_87, %c0_88] : memref<8x16xbf16, #tpu.memory_space<vmem>>, vector<8x16xbf16>
    %cst_89 = arith.constant dense<0.000000e+00> : vector<8x256xf32>
    %110 = tpu.matmul %109, %103, %cst_89 {dimension_numbers = #tpu.dot_dimension_numbers<[1], [0], [0], [1], [0, 0, 1, 1], [], []>} : vector<8x16xbf16>, vector<16x256xbf16>, vector<8x256xf32> -> vector<8x256xf32>
    %c0_90 = arith.constant 0 : index
    %c0_91 = arith.constant 0 : index
    %111 = vector.load %arg33[%c0_90, %c0_91] : memref<8x1xf32, #tpu.memory_space<vmem>>, vector<8x1xf32>
    %112 = vector.broadcast %111 : vector<8x1xf32> to vector<8x256xf32>
    %113 = arith.addf %110, %112 : vector<8x256xf32>
    %cst_92 = arith.constant 0.000000e+00 : f32
    %114 = vector.broadcast %cst_92 : f32 to vector<8x256xf32>
    %115 = arith.maximumf %113, %114 : vector<8x256xf32>
    %c0_93 = arith.constant 0 : index
    %c0_94 = arith.constant 0 : index
    %116 = vector.load %arg34[%c0_93, %c0_94] : memref<1x8xbf16, #tpu.memory_space<vmem>>, vector<1x8xbf16>
    %117 = arith.truncf %115 : vector<8x256xf32> to vector<8x256xbf16>
    %cst_95 = arith.constant dense<0.000000e+00> : vector<1x256xf32>
    %118 = tpu.matmul %116, %117, %cst_95 {dimension_numbers = #tpu.dot_dimension_numbers<[1], [0], [0], [1], [0, 0, 1, 1], [], []>} : vector<1x8xbf16>, vector<8x256xbf16>, vector<1x256xf32> -> vector<1x256xf32>
    %c0_96 = arith.constant 0 : index
    %c0_97 = arith.constant 0 : index
    %119 = vector.load %arg35[%c0_96, %c0_97] : memref<1x1xf32, #tpu.memory_space<vmem>>, vector<1x1xf32>
    %120 = vector.broadcast %119 : vector<1x1xf32> to vector<1x256xf32>
    %121 = arith.addf %118, %120 : vector<1x256xf32>
    %122 = tpu.concatenate %108, %121 in 0 : vector<2x256xf32>, vector<1x256xf32> -> vector<3x256xf32>
    %c0_98 = arith.constant 0 : index
    %c0_99 = arith.constant 0 : index
    %c0_100 = arith.constant 0 : index
    %123 = vector.load %arg36[%c0_98, %c0_99, %c0_100] : memref<1x3x256xf32, #tpu.memory_space<vmem>>, vector<1x3x256xf32>
    %124 = vector.shape_cast %123 : vector<1x3x256xf32> to vector<3x256xf32>
    %125 = vector.shape_cast %122 : vector<3x256xf32> to vector<1x3x256xf32>
    tpu.vector_store %arg36[%c0_98, %c0_99, %c0_100], %125 {strides = array<i32>} : memref<1x3x256xf32, #tpu.memory_space<vmem>>, vector<1x3x256xf32>,
    %c0_i32 = arith.constant 0 : i32
    %126 = arith.cmpi eq, %arg1, %c0_i32 : i32
    %127 = arith.extui %126 : i1 to i32
    %c0_i32_101 = arith.constant 0 : i32
    %128 = arith.cmpi ne, %127, %c0_i32_101 : i32
    scf.if %128 {
      %cst_109 = arith.constant 0.000000e+00 : f32
      %138 = vector.broadcast %cst_109 : f32 to vector<8x1xf32>
      %c0_110 = arith.constant 0 : index
      %c0_111 = arith.constant 0 : index
      %c0_112 = arith.constant 0 : index
      %139 = vector.load %arg37[%c0_110, %c0_111, %c0_112] : memref<1x8x1xf32, #tpu.memory_space<vmem>>, vector<1x8x1xf32>
      %140 = vector.shape_cast %139 : vector<1x8x1xf32> to vector<8x1xf32>
      %141 = vector.shape_cast %138 : vector<8x1xf32> to vector<1x8x1xf32>
      tpu.vector_store %arg37[%c0_110, %c0_111, %c0_112], %141 {strides = array<i32>} : memref<1x8x1xf32, #tpu.memory_space<vmem>>, vector<1x8x1xf32>,
    } else {
    }
    %c0_102 = arith.constant 0 : index
    %c0_103 = arith.constant 0 : index
    %c0_104 = arith.constant 0 : index
    %129 = vector.load %arg37[%c0_102, %c0_103, %c0_104] : memref<1x8x1xf32, #tpu.memory_space<vmem>>, vector<1x8x1xf32>
    %130 = vector.shape_cast %129 : vector<1x8x1xf32> to vector<8x1xf32>
    %131 = vector.extract_strided_slice %102 {offsets = [8, 0], sizes = [8, 256], strides = [1, 1]} : vector<16x256xf32> to vector<8x256xf32>
    %cst_105 = arith.constant dense<0.000000e+00> : vector<8xf32>
    %132 = vector.multi_reduction <add>, %131, %cst_105 [1] : vector<8x256xf32> to vector<8xf32>
    %133 = vector.shape_cast %132 : vector<8xf32> to vector<8x1xf32>
    %134 = arith.addf %130, %133 : vector<8x1xf32>
    %c0_106 = arith.constant 0 : index
    %c0_107 = arith.constant 0 : index
    %c0_108 = arith.constant 0 : index
    %135 = vector.load %arg37[%c0_106, %c0_107, %c0_108] : memref<1x8x1xf32, #tpu.memory_space<vmem>>, vector<1x8x1xf32>
    %136 = vector.shape_cast %135 : vector<1x8x1xf32> to vector<8x1xf32>
    %137 = vector.shape_cast %134 : vector<8x1xf32> to vector<1x8x1xf32>
    tpu.vector_store %arg37[%c0_106, %c0_107, %c0_108], %137 {strides = array<i32>} : memref<1x8x1xf32, #tpu.memory_space<vmem>>, vector<1x8x1xf32>,
    return
  }
  func.func @transform_0(%arg0: i32, %arg1: i32) -> (i32, i32, i32) {
    %c0_i32 = arith.constant 0 : i32
    %c0_i32_0 = arith.constant 0 : i32
    return %arg0, %c0_i32, %arg1 : i32, i32, i32
  }
  func.func @transform_1(%arg0: i32, %arg1: i32) -> (i32, i32, i32) {
    %c0_i32 = arith.constant 0 : i32
    %c0_i32_0 = arith.constant 0 : i32
    return %arg0, %c0_i32, %arg1 : i32, i32, i32
  }
  func.func @transform_2(%arg0: i32, %arg1: i32) -> (i32, i32, i32) {
    %c0_i32 = arith.constant 0 : i32
    %c0_i32_0 = arith.constant 0 : i32
    return %arg0, %c0_i32, %arg1 : i32, i32, i32
  }
  func.func @transform_3(%arg0: i32, %arg1: i32) -> (i32, i32, i32) {
    %c0_i32 = arith.constant 0 : i32
    %c0_i32_0 = arith.constant 0 : i32
    return %arg0, %c0_i32, %arg1 : i32, i32, i32
  }
  func.func @transform_4(%arg0: i32, %arg1: i32) -> (i32, i32) {
    %c0_i32 = arith.constant 0 : i32
    %c0_i32_0 = arith.constant 0 : i32
    %c0_i32_1 = arith.constant 0 : i32
    return %c0_i32, %c0_i32_0 : i32, i32
  }
  func.func @transform_5(%arg0: i32, %arg1: i32) -> (i32, i32) {
    %c0_i32 = arith.constant 0 : i32
    %c0_i32_0 = arith.constant 0 : i32
    %c0_i32_1 = arith.constant 0 : i32
    return %c0_i32, %c0_i32_0 : i32, i32
  }
  func.func @transform_6(%arg0: i32, %arg1: i32) -> (i32, i32) {
    %c0_i32 = arith.constant 0 : i32
    %c0_i32_0 = arith.constant 0 : i32
    %c0_i32_1 = arith.constant 0 : i32
    return %c0_i32, %c0_i32_0 : i32, i32
  }
  func.func @transform_7(%arg0: i32, %arg1: i32) -> (i32, i32) {
    %c0_i32 = arith.constant 0 : i32
    %c0_i32_0 = arith.constant 0 : i32
    %c0_i32_1 = arith.constant 0 : i32
    return %c0_i32, %c0_i32_0 : i32, i32
  }
  func.func @transform_8(%arg0: i32, %arg1: i32) -> (i32, i32) {
    %c0_i32 = arith.constant 0 : i32
    %c0_i32_0 = arith.constant 0 : i32
    %c0_i32_1 = arith.constant 0 : i32
    return %c0_i32, %c0_i32_0 : i32, i32
  }
  func.func @transform_9(%arg0: i32, %arg1: i32) -> (i32, i32) {
    %c0_i32 = arith.constant 0 : i32
    %c0_i32_0 = arith.constant 0 : i32
    %c0_i32_1 = arith.constant 0 : i32
    return %c0_i32, %c0_i32_0 : i32, i32
  }
  func.func @transform_10(%arg0: i32, %arg1: i32) -> (i32, i32) {
    %c0_i32 = arith.constant 0 : i32
    %c0_i32_0 = arith.constant 0 : i32
    %c0_i32_1 = arith.constant 0 : i32
    return %c0_i32, %c0_i32_0 : i32, i32
  }
  func.func @transform_11(%arg0: i32, %arg1: i32) -> (i32, i32) {
    %c0_i32 = arith.constant 0 : i32
    %c0_i32_0 = arith.constant 0 : i32
    %c0_i32_1 = arith.constant 0 : i32
    return %c0_i32, %c0_i32_0 : i32, i32
  }
  func.func @transform_12(%arg0: i32, %arg1: i32) -> (i32, i32) {
    %c0_i32 = arith.constant 0 : i32
    %c0_i32_0 = arith.constant 0 : i32
    %c0_i32_1 = arith.constant 0 : i32
    return %c0_i32, %c0_i32_0 : i32, i32
  }
  func.func @transform_13(%arg0: i32, %arg1: i32) -> (i32, i32) {
    %c0_i32 = arith.constant 0 : i32
    %c0_i32_0 = arith.constant 0 : i32
    %c0_i32_1 = arith.constant 0 : i32
    return %c0_i32, %c0_i32_0 : i32, i32
  }
  func.func @transform_14(%arg0: i32, %arg1: i32) -> (i32, i32) {
    %c0_i32 = arith.constant 0 : i32
    %c0_i32_0 = arith.constant 0 : i32
    %c0_i32_1 = arith.constant 0 : i32
    return %c0_i32, %c0_i32_0 : i32, i32
  }
  func.func @transform_15(%arg0: i32, %arg1: i32) -> (i32, i32) {
    %c0_i32 = arith.constant 0 : i32
    %c0_i32_0 = arith.constant 0 : i32
    %c0_i32_1 = arith.constant 0 : i32
    return %c0_i32, %c0_i32_0 : i32, i32
  }
  func.func @transform_16(%arg0: i32, %arg1: i32) -> (i32, i32) {
    %c0_i32 = arith.constant 0 : i32
    %c0_i32_0 = arith.constant 0 : i32
    %c0_i32_1 = arith.constant 0 : i32
    return %c0_i32, %c0_i32_0 : i32, i32
  }
  func.func @transform_17(%arg0: i32, %arg1: i32) -> (i32, i32) {
    %c0_i32 = arith.constant 0 : i32
    %c0_i32_0 = arith.constant 0 : i32
    %c0_i32_1 = arith.constant 0 : i32
    return %c0_i32, %c0_i32_0 : i32, i32
  }
  func.func @transform_18(%arg0: i32, %arg1: i32) -> (i32, i32) {
    %c0_i32 = arith.constant 0 : i32
    %c0_i32_0 = arith.constant 0 : i32
    %c0_i32_1 = arith.constant 0 : i32
    return %c0_i32, %c0_i32_0 : i32, i32
  }
  func.func @transform_19(%arg0: i32, %arg1: i32) -> (i32, i32) {
    %c0_i32 = arith.constant 0 : i32
    %c0_i32_0 = arith.constant 0 : i32
    %c0_i32_1 = arith.constant 0 : i32
    return %c0_i32, %c0_i32_0 : i32, i32
  }
  func.func @transform_20(%arg0: i32, %arg1: i32) -> (i32, i32) {
    %c0_i32 = arith.constant 0 : i32
    %c0_i32_0 = arith.constant 0 : i32
    %c0_i32_1 = arith.constant 0 : i32
    return %c0_i32, %c0_i32_0 : i32, i32
  }
  func.func @transform_21(%arg0: i32, %arg1: i32) -> (i32, i32) {
    %c0_i32 = arith.constant 0 : i32
    %c0_i32_0 = arith.constant 0 : i32
    %c0_i32_1 = arith.constant 0 : i32
    return %c0_i32, %c0_i32_0 : i32, i32
  }
  func.func @transform_22(%arg0: i32, %arg1: i32) -> (i32, i32) {
    %c0_i32 = arith.constant 0 : i32
    %c0_i32_0 = arith.constant 0 : i32
    %c0_i32_1 = arith.constant 0 : i32
    return %c0_i32, %c0_i32_0 : i32, i32
  }
  func.func @transform_23(%arg0: i32, %arg1: i32) -> (i32, i32) {
    %c0_i32 = arith.constant 0 : i32
    %c0_i32_0 = arith.constant 0 : i32
    %c0_i32_1 = arith.constant 0 : i32
    return %c0_i32, %c0_i32_0 : i32, i32
  }
  func.func @transform_24(%arg0: i32, %arg1: i32) -> (i32, i32) {
    %c0_i32 = arith.constant 0 : i32
    %c0_i32_0 = arith.constant 0 : i32
    %c0_i32_1 = arith.constant 0 : i32
    return %c0_i32, %c0_i32_0 : i32, i32
  }
  func.func @transform_25(%arg0: i32, %arg1: i32) -> (i32, i32) {
    %c0_i32 = arith.constant 0 : i32
    %c0_i32_0 = arith.constant 0 : i32
    %c0_i32_1 = arith.constant 0 : i32
    return %c0_i32, %c0_i32_0 : i32, i32
  }
  func.func @transform_26(%arg0: i32, %arg1: i32) -> (i32, i32) {
    %c0_i32 = arith.constant 0 : i32
    %c0_i32_0 = arith.constant 0 : i32
    %c0_i32_1 = arith.constant 0 : i32
    return %c0_i32, %c0_i32_0 : i32, i32
  }
  func.func @transform_27(%arg0: i32, %arg1: i32) -> (i32, i32) {
    %c0_i32 = arith.constant 0 : i32
    %c0_i32_0 = arith.constant 0 : i32
    %c0_i32_1 = arith.constant 0 : i32
    return %c0_i32, %c0_i32_0 : i32, i32
  }
  func.func @transform_28(%arg0: i32, %arg1: i32) -> (i32, i32) {
    %c0_i32 = arith.constant 0 : i32
    %c0_i32_0 = arith.constant 0 : i32
    %c0_i32_1 = arith.constant 0 : i32
    return %c0_i32, %c0_i32_0 : i32, i32
  }
  func.func @transform_29(%arg0: i32, %arg1: i32) -> (i32, i32) {
    %c0_i32 = arith.constant 0 : i32
    %c0_i32_0 = arith.constant 0 : i32
    %c0_i32_1 = arith.constant 0 : i32
    return %c0_i32, %c0_i32_0 : i32, i32
  }
  func.func @transform_30(%arg0: i32, %arg1: i32) -> (i32, i32) {
    %c0_i32 = arith.constant 0 : i32
    %c0_i32_0 = arith.constant 0 : i32
    %c0_i32_1 = arith.constant 0 : i32
    return %c0_i32, %c0_i32_0 : i32, i32
  }
  func.func @transform_31(%arg0: i32, %arg1: i32) -> (i32, i32) {
    %c0_i32 = arith.constant 0 : i32
    %c0_i32_0 = arith.constant 0 : i32
    %c0_i32_1 = arith.constant 0 : i32
    return %c0_i32, %c0_i32_0 : i32, i32
  }
  func.func @transform_32(%arg0: i32, %arg1: i32) -> (i32, i32) {
    %c0_i32 = arith.constant 0 : i32
    %c0_i32_0 = arith.constant 0 : i32
    %c0_i32_1 = arith.constant 0 : i32
    return %c0_i32, %c0_i32_0 : i32, i32
  }
  func.func @transform_33(%arg0: i32, %arg1: i32) -> (i32, i32) {
    %c0_i32 = arith.constant 0 : i32
    %c0_i32_0 = arith.constant 0 : i32
    %c0_i32_1 = arith.constant 0 : i32
    return %c0_i32, %c0_i32_0 : i32, i32
  }
  func.func @transform_34(%arg0: i32, %arg1: i32) -> (i32, i32, i32) {
    %c0_i32 = arith.constant 0 : i32
    %c0_i32_0 = arith.constant 0 : i32
    return %arg0, %c0_i32, %arg1 : i32, i32, i32
  }
  func.func @transform_35(%arg0: i32, %arg1: i32) -> (i32, i32, i32) {
    %c0_i32 = arith.constant 0 : i32
    %c0_i32_0 = arith.constant 0 : i32
    %c0_i32_1 = arith.constant 0 : i32
    return %arg0, %c0_i32, %c0_i32_0 : i32, i32, i32
  }
}

</mosaic_0001>

<llo_original>
// kernel: _lambda_.1
$region0: #{_lambda_.1}
  #allocation0 [shape = 'u32[]', space=smem, size = 0x4, offset = 0x4, fixed_abs, tag = 'smem constant byte address 0x4 - core index']
  #allocation1 [shape = 'u32[144,128]{1,0:T(1,128)}', space=vmem, size = 0x12000, scoped, tag = 'internal scratch']
  #allocation2 [shape = 'f32[1,1]{1,0:T(1,128)S(1)}', space=vmem, size = 0x200, scoped, tag = 'scoped memory for _lambda_.1']
  %s0 = inlined_call_operand.smem [shape: u32[36], index: -1, kind: input, shape index: {}]
  %s1 = sld [smem:[%s0]]
  %s2 = scalar_lea.smem %s0, 1
  %s3 = sld [smem:[%s2]]
  %s4 = scalar_lea.smem %s0, 2
  %s5 = sld [smem:[%s4]]
  %s6 = scalar_lea.smem %s0, 3
  %s7 = sld [smem:[%s6]]
  %s8 = scalar_lea.smem %s0, 4
  %s9 = sld [smem:[%s8]]
  %s10 = scalar_lea.smem %s0, 5
  %s11 = sld [smem:[%s10]]
  %s12 = scalar_lea.smem %s0, 6
  %s13 = sld [smem:[%s12]]
  %s14 = scalar_lea.smem %s0, 7
  %s15 = sld [smem:[%s14]]
  %s16 = scalar_lea.smem %s0, 8
  %s17 = sld [smem:[%s16]]
  %s18 = scalar_lea.smem %s0, 9
  %s19 = sld [smem:[%s18]]
  %s20 = scalar_lea.smem %s0, 10
  %s21 = sld [smem:[%s20]]
  %s22 = scalar_lea.smem %s0, 11
  %s23 = sld [smem:[%s22]]
  %s24 = scalar_lea.smem %s0, 12
  %s25 = sld [smem:[%s24]]
  %s26 = scalar_lea.smem %s0, 13
  %s27 = sld [smem:[%s26]]
  %s28 = scalar_lea.smem %s0, 14
  %s29 = sld [smem:[%s28]]
  %s30 = scalar_lea.smem %s0, 15
  %s31 = sld [smem:[%s30]]
  %s32 = scalar_lea.smem %s0, 16
  %s33 = sld [smem:[%s32]]
  %s34 = scalar_lea.smem %s0, 17
  %s35 = sld [smem:[%s34]]
  %s36 = scalar_lea.smem %s0, 18
  %s37 = sld [smem:[%s36]]
  %s38 = scalar_lea.smem %s0, 19
  %s39 = sld [smem:[%s38]]
  %s40 = scalar_lea.smem %s0, 20
  %s41 = sld [smem:[%s40]]
  %s42 = scalar_lea.smem %s0, 21
  %s43 = sld [smem:[%s42]]
  %s44 = scalar_lea.smem %s0, 22
  %s45 = sld [smem:[%s44]]
  %s46 = scalar_lea.smem %s0, 23
  %s47 = sld [smem:[%s46]]
  %s48 = scalar_lea.smem %s0, 24
  %s49 = sld [smem:[%s48]]
  %s50 = scalar_lea.smem %s0, 25
  %s51 = sld [smem:[%s50]]
  %s52 = scalar_lea.smem %s0, 26
  %s53 = sld [smem:[%s52]]
  %s54 = scalar_lea.smem %s0, 27
  %s55 = sld [smem:[%s54]]
  %s56 = scalar_lea.smem %s0, 28
  %s57 = sld [smem:[%s56]]
  %s58 = scalar_lea.smem %s0, 29
  %s59 = sld [smem:[%s58]]
  %s60 = scalar_lea.smem %s0, 30
  %s61 = sld [smem:[%s60]]
  %s62 = scalar_lea.smem %s0, 31
  %s63 = sld [smem:[%s62]]
  %s64 = scalar_lea.smem %s0, 32
  %s65 = sld [smem:[%s64]]
  %s66 = scalar_lea.smem %s0, 33
  %s67 = sld [smem:[%s66]]
  %s68 = scalar_lea.smem %s0, 34
  %s69 = sld [smem:[%s68]]
  %s70 = scalar_lea.smem %s0, 35
  %s71 = sld [smem:[%s70]]
  %72 = xla_tuple %s69, %s71
  %s73 = sld [smem:[#allocation0]]
  $region181: #{_lambda_.1} parent=0
    _
  %s75 = ssub.s32 1, %s73
  %s76 = scalar_select 0, %s75, %s73
  %v77 = vstv %s67
  %78 = vst [vmem:[#allocation2] sm:$0x1] %v77
  loop: start=0, step=1, limit=4
  $region2: #{_lambda_.1} parent=0 // loop_pre_header
    _
  $region3: #{_lambda_.1} parent=0 // loop_header
    %s80 = sphi 0, %s84
    %p81 = scmp.ge.s32.totalorder %s80, 4
    %s87 = sphi 0, %s99
    %s88 = sphi 0, %s95
    %s89 = sphi 0, %s87
    %s90 = sphi 0, %s88
    %s91 = sphi 0, %s89
    %s92 = sphi 0, %s90
    %s104 = sphi 0, %s106
    %s107 = sphi 0, %s104
    %s108 = sphi 0, %s107
    %s124 = sphi 0, %s108
    %s132 = sphi 0, %s134
    %s135 = sphi 0, %s132
    %s136 = sphi 0, %s135
    %s152 = sphi 0, %s136
    %s160 = sphi 0, %s162
    %s163 = sphi 0, %s160
    %s164 = sphi 0, %s163
    %s180 = sphi 0, %s164
    %s188 = sphi 0, %s190
    %s191 = sphi 0, %s188
    %s192 = sphi 0, %s191
    %s208 = sphi 0, %s192
    %s212 = sphi 0, %s212
    %s214 = sphi 0, %s212
    %s215 = sphi 0, %s214
    %s229 = sphi 0, %s215
    %s233 = sphi 0, %s233
    %s235 = sphi 0, %s233
    %s236 = sphi 0, %s235
    %s250 = sphi 0, %s236
    %s254 = sphi 0, %s254
    %s256 = sphi 0, %s254
    %s257 = sphi 0, %s256
    %s271 = sphi 0, %s257
    %s275 = sphi 0, %s275
    %s277 = sphi 0, %s275
    %s278 = sphi 0, %s277
    %s292 = sphi 0, %s278
    %s296 = sphi 0, %s296
    %s298 = sphi 0, %s296
    %s299 = sphi 0, %s298
    %s313 = sphi 0, %s299
    %s317 = sphi 0, %s317
    %s319 = sphi 0, %s317
    %s320 = sphi 0, %s319
    %s334 = sphi 0, %s320
    %s338 = sphi 0, %s338
    %s340 = sphi 0, %s338
    %s341 = sphi 0, %s340
    %s355 = sphi 0, %s341
    %s359 = sphi 0, %s359
    %s361 = sphi 0, %s359
    %s362 = sphi 0, %s361
    %s376 = sphi 0, %s362
    %s380 = sphi 0, %s380
    %s382 = sphi 0, %s380
    %s383 = sphi 0, %s382
    %s397 = sphi 0, %s383
    %s401 = sphi 0, %s401
    %s403 = sphi 0, %s401
    %s404 = sphi 0, %s403
    %s418 = sphi 0, %s404
    %s422 = sphi 0, %s422
    %s424 = sphi 0, %s422
    %s425 = sphi 0, %s424
    %s439 = sphi 0, %s425
    %s443 = sphi 0, %s443
    %s445 = sphi 0, %s443
    %s446 = sphi 0, %s445
    %s460 = sphi 0, %s446
    %s464 = sphi 0, %s464
    %s466 = sphi 0, %s464
    %s467 = sphi 0, %s466
    %s481 = sphi 0, %s467
    %s485 = sphi 0, %s485
    %s487 = sphi 0, %s485
    %s488 = sphi 0, %s487
    %s502 = sphi 0, %s488
    %s506 = sphi 0, %s506
    %s508 = sphi 0, %s506
    %s509 = sphi 0, %s508
    %s523 = sphi 0, %s509
    %s527 = sphi 0, %s527
    %s529 = sphi 0, %s527
    %s530 = sphi 0, %s529
    %s544 = sphi 0, %s530
    %s548 = sphi 0, %s548
    %s550 = sphi 0, %s548
    %s551 = sphi 0, %s550
    %s565 = sphi 0, %s551
    %s569 = sphi 0, %s569
    %s571 = sphi 0, %s569
    %s572 = sphi 0, %s571
    %s586 = sphi 0, %s572
    %s590 = sphi 0, %s590
    %s592 = sphi 0, %s590
    %s593 = sphi 0, %s592
    %s607 = sphi 0, %s593
    %s611 = sphi 0, %s611
    %s613 = sphi 0, %s611
    %s614 = sphi 0, %s613
    %s628 = sphi 0, %s614
    %s632 = sphi 0, %s632
    %s634 = sphi 0, %s632
    %s635 = sphi 0, %s634
    %s649 = sphi 0, %s635
    %s653 = sphi 0, %s653
    %s655 = sphi 0, %s653
    %s656 = sphi 0, %s655
    %s670 = sphi 0, %s656
    %s674 = sphi 0, %s674
    %s676 = sphi 0, %s674
    %s677 = sphi 0, %s676
    %s691 = sphi 0, %s677
    %s695 = sphi 0, %s695
    %s697 = sphi 0, %s695
    %s698 = sphi 0, %s697
    %s712 = sphi 0, %s698
    %s716 = sphi 0, %s716
    %s718 = sphi 0, %s716
    %s719 = sphi 0, %s718
    %s733 = sphi 0, %s719
    %s737 = sphi 0, %s737
    %s739 = sphi 0, %s737
    %s740 = sphi 0, %s739
    %s754 = sphi 0, %s740
    %s758 = sphi 0, %s758
    %s760 = sphi 0, %s758
    %s761 = sphi 0, %s760
    %s775 = sphi 0, %s761
    %s779 = sphi 0, %s779
    %s781 = sphi 0, %s779
    %s782 = sphi 0, %s781
    %s796 = sphi 0, %s782
    %s800 = sphi 0, %s800
    %s802 = sphi 0, %s800
    %s803 = sphi 0, %s802
    %s817 = sphi 0, %s803
    %s821 = sphi 0, %s821
    %s823 = sphi 0, %s821
    %s824 = sphi 0, %s823
    %s838 = sphi 0, %s824
    %s846 = sphi 0, %s848
    %s849 = sphi 0, %s846
    %s850 = sphi 0, %s849
    %s866 = sphi 0, %s850
    %s872 = sphi 0, %s874
    %s875 = sphi 0, %s872
    %s876 = sphi 0, %s875
    %s892 = sphi 0, %s876
  $region4: #{_lambda_.1} parent=0 // loop_header_branch
    %83 = sbr.rel (%p81) target = $region8
  $region5: #{_lambda_.1} parent=0 // loop_body
    %s85 = ssub.s32 %s80, 1
    %s86 = ssub.s32 %s80, 2
    %s93 = sadd.s32 1, %s88
    %p94 = scmp.ge.s32.totalorder %s93, 1
    %s95 = scalar_select %p94, 0, %s93
    %s96 = sadd.s32 1, %s87
    %s97 = scalar_select %p94, %s96, %s87
    %p98 = scmp.ge.s32.totalorder %s97, 2
    %s99 = scalar_select %p98, 0, %s97
    %s100 = ssub.s32 %s87, %s99
    %s101 = ssub.s32 %s88, %s95
    %s102 = sor.u32 %s100, %s101
    %p103 = scmp.eq.s32.totalorder %s102, 0
    %s105 = sadd.s32 %s104, 1
    %s106 = scalar_select %p103, %s104, %s105
    %p109 = pneg %p103
    %p110 = scmp.eq.s32.totalorder %s80, 1
    %p111 = por %p109, %p110
    %p112 = scmp.ne.s32.totalorder %s104, %s107
    %p113 = scmp.eq.s32.totalorder %s80, 0
    %p114 = por %p112, %p113
    %p115 = scmp.ne.s32.totalorder %s104, %s107
    %p116 = scmp.eq.s32.totalorder %s85, 1
    %p117 = por %p115, %p116
    %p118 = scmp.ne.s32.totalorder %s107, %s108
    %p119 = scmp.eq.s32.totalorder %s85, 0
    %p120 = por %p118, %p119
    %p121 = scmp.ne.s32.totalorder %s107, %s108
    %p122 = scmp.eq.s32.totalorder %s86, 1
    %p123 = por %p121, %p122
    %p125 = scmp.ne.s32.totalorder %s108, %s124
    %p126 = scmp.eq.s32.totalorder %s86, 0
    %p127 = por %p125, %p126
    %s128 = ssub.s32 %s87, %s99
    %s129 = ssub.s32 %s88, %s95
    %s130 = sor.u32 %s128, %s129
    %p131 = scmp.eq.s32.totalorder %s130, 0
    %s133 = sadd.s32 %s132, 1
    %s134 = scalar_select %p131, %s132, %s133
    %p137 = pneg %p131
    %p138 = scmp.eq.s32.totalorder %s80, 1
    %p139 = por %p137, %p138
    %p140 = scmp.ne.s32.totalorder %s132, %s135
    %p141 = scmp.eq.s32.totalorder %s80, 0
    %p142 = por %p140, %p141
    %p143 = scmp.ne.s32.totalorder %s132, %s135
    %p144 = scmp.eq.s32.totalorder %s85, 1
    %p145 = por %p143, %p144
    %p146 = scmp.ne.s32.totalorder %s135, %s136
    %p147 = scmp.eq.s32.totalorder %s85, 0
    %p148 = por %p146, %p147
    %p149 = scmp.ne.s32.totalorder %s135, %s136
    %p150 = scmp.eq.s32.totalorder %s86, 1
    %p151 = por %p149, %p150
    %p153 = scmp.ne.s32.totalorder %s136, %s152
    %p154 = scmp.eq.s32.totalorder %s86, 0
    %p155 = por %p153, %p154
    %s156 = ssub.s32 %s87, %s99
    %s157 = ssub.s32 %s88, %s95
    %s158 = sor.u32 %s156, %s157
    %p159 = scmp.eq.s32.totalorder %s158, 0
    %s161 = sadd.s32 %s160, 1
    %s162 = scalar_select %p159, %s160, %s161
    %p165 = pneg %p159
    %p166 = scmp.eq.s32.totalorder %s80, 1
    %p167 = por %p165, %p166
    %p168 = scmp.ne.s32.totalorder %s160, %s163
    %p169 = scmp.eq.s32.totalorder %s80, 0
    %p170 = por %p168, %p169
    %p171 = scmp.ne.s32.totalorder %s160, %s163
    %p172 = scmp.eq.s32.totalorder %s85, 1
    %p173 = por %p171, %p172
    %p174 = scmp.ne.s32.totalorder %s163, %s164
    %p175 = scmp.eq.s32.totalorder %s85, 0
    %p176 = por %p174, %p175
    %p177 = scmp.ne.s32.totalorder %s163, %s164
    %p178 = scmp.eq.s32.totalorder %s86, 1
    %p179 = por %p177, %p178
    %p181 = scmp.ne.s32.totalorder %s164, %s180
    %p182 = scmp.eq.s32.totalorder %s86, 0
    %p183 = por %p181, %p182
    %s184 = ssub.s32 %s87, %s99
    %s185 = ssub.s32 %s88, %s95
    %s186 = sor.u32 %s184, %s185
    %p187 = scmp.eq.s32.totalorder %s186, 0
    %s189 = sadd.s32 %s188, 1
    %s190 = scalar_select %p187, %s188, %s189
    %p193 = pneg %p187
    %p194 = scmp.eq.s32.totalorder %s80, 1
    %p195 = por %p193, %p194
    %p196 = scmp.ne.s32.totalorder %s188, %s191
    %p197 = scmp.eq.s32.totalorder %s80, 0
    %p198 = por %p196, %p197
    %p199 = scmp.ne.s32.totalorder %s188, %s191
    %p200 = scmp.eq.s32.totalorder %s85, 1
    %p201 = por %p199, %p200
    %p202 = scmp.ne.s32.totalorder %s191, %s192
    %p203 = scmp.eq.s32.totalorder %s85, 0
    %p204 = por %p202, %p203
    %p205 = scmp.ne.s32.totalorder %s191, %s192
    %p206 = scmp.eq.s32.totalorder %s86, 1
    %p207 = por %p205, %p206
    %p209 = scmp.ne.s32.totalorder %s192, %s208
    %p210 = scmp.eq.s32.totalorder %s86, 0
    %p211 = por %p209, %p210
    %s213 = sadd.s32 %s212, 1
    %p216 = scmp.eq.s32.totalorder %s80, 1
    %p217 = scmp.ne.s32.totalorder %s212, %s214
    %p218 = scmp.eq.s32.totalorder %s80, 0
    %p219 = por %p217, %p218
    %p220 = scmp.ne.s32.totalorder %s212, %s214
    %p221 = scmp.eq.s32.totalorder %s85, 1
    %p222 = por %p220, %p221
    %p223 = scmp.ne.s32.totalorder %s214, %s215
    %p224 = scmp.eq.s32.totalorder %s85, 0
    %p225 = por %p223, %p224
    %p226 = scmp.ne.s32.totalorder %s214, %s215
    %p227 = scmp.eq.s32.totalorder %s86, 1
    %p228 = por %p226, %p227
    %p230 = scmp.ne.s32.totalorder %s215, %s229
    %p231 = scmp.eq.s32.totalorder %s86, 0
    %p232 = por %p230, %p231
    %s234 = sadd.s32 %s233, 1
    %p237 = scmp.eq.s32.totalorder %s80, 1
    %p238 = scmp.ne.s32.totalorder %s233, %s235
    %p239 = scmp.eq.s32.totalorder %s80, 0
    %p240 = por %p238, %p239
    %p241 = scmp.ne.s32.totalorder %s233, %s235
    %p242 = scmp.eq.s32.totalorder %s85, 1
    %p243 = por %p241, %p242
    %p244 = scmp.ne.s32.totalorder %s235, %s236
    %p245 = scmp.eq.s32.totalorder %s85, 0
    %p246 = por %p244, %p245
    %p247 = scmp.ne.s32.totalorder %s235, %s236
    %p248 = scmp.eq.s32.totalorder %s86, 1
    %p249 = por %p247, %p248
    %p251 = scmp.ne.s32.totalorder %s236, %s250
    %p252 = scmp.eq.s32.totalorder %s86, 0
    %p253 = por %p251, %p252
    %s255 = sadd.s32 %s254, 1
    %p258 = scmp.eq.s32.totalorder %s80, 1
    %p259 = scmp.ne.s32.totalorder %s254, %s256
    %p260 = scmp.eq.s32.totalorder %s80, 0
    %p261 = por %p259, %p260
    %p262 = scmp.ne.s32.totalorder %s254, %s256
    %p263 = scmp.eq.s32.totalorder %s85, 1
    %p264 = por %p262, %p263
    %p265 = scmp.ne.s32.totalorder %s256, %s257
    %p266 = scmp.eq.s32.totalorder %s85, 0
    %p267 = por %p265, %p266
    %p268 = scmp.ne.s32.totalorder %s256, %s257
    %p269 = scmp.eq.s32.totalorder %s86, 1
    %p270 = por %p268, %p269
    %p272 = scmp.ne.s32.totalorder %s257, %s271
    %p273 = scmp.eq.s32.totalorder %s86, 0
    %p274 = por %p272, %p273
    %s276 = sadd.s32 %s275, 1
    %p279 = scmp.eq.s32.totalorder %s80, 1
    %p280 = scmp.ne.s32.totalorder %s275, %s277
    %p281 = scmp.eq.s32.totalorder %s80, 0
    %p282 = por %p280, %p281
    %p283 = scmp.ne.s32.totalorder %s275, %s277
    %p284 = scmp.eq.s32.totalorder %s85, 1
    %p285 = por %p283, %p284
    %p286 = scmp.ne.s32.totalorder %s277, %s278
    %p287 = scmp.eq.s32.totalorder %s85, 0
    %p288 = por %p286, %p287
    %p289 = scmp.ne.s32.totalorder %s277, %s278
    %p290 = scmp.eq.s32.totalorder %s86, 1
    %p291 = por %p289, %p290
    %p293 = scmp.ne.s32.totalorder %s278, %s292
    %p294 = scmp.eq.s32.totalorder %s86, 0
    %p295 = por %p293, %p294
    %s297 = sadd.s32 %s296, 1
    %p300 = scmp.eq.s32.totalorder %s80, 1
    %p301 = scmp.ne.s32.totalorder %s296, %s298
    %p302 = scmp.eq.s32.totalorder %s80, 0
    %p303 = por %p301, %p302
    %p304 = scmp.ne.s32.totalorder %s296, %s298
    %p305 = scmp.eq.s32.totalorder %s85, 1
    %p306 = por %p304, %p305
    %p307 = scmp.ne.s32.totalorder %s298, %s299
    %p308 = scmp.eq.s32.totalorder %s85, 0
    %p309 = por %p307, %p308
    %p310 = scmp.ne.s32.totalorder %s298, %s299
    %p311 = scmp.eq.s32.totalorder %s86, 1
    %p312 = por %p310, %p311
    %p314 = scmp.ne.s32.totalorder %s299, %s313
    %p315 = scmp.eq.s32.totalorder %s86, 0
    %p316 = por %p314, %p315
    %s318 = sadd.s32 %s317, 1
    %p321 = scmp.eq.s32.totalorder %s80, 1
    %p322 = scmp.ne.s32.totalorder %s317, %s319
    %p323 = scmp.eq.s32.totalorder %s80, 0
    %p324 = por %p322, %p323
    %p325 = scmp.ne.s32.totalorder %s317, %s319
    %p326 = scmp.eq.s32.totalorder %s85, 1
    %p327 = por %p325, %p326
    %p328 = scmp.ne.s32.totalorder %s319, %s320
    %p329 = scmp.eq.s32.totalorder %s85, 0
    %p330 = por %p328, %p329
    %p331 = scmp.ne.s32.totalorder %s319, %s320
    %p332 = scmp.eq.s32.totalorder %s86, 1
    %p333 = por %p331, %p332
    %p335 = scmp.ne.s32.totalorder %s320, %s334
    %p336 = scmp.eq.s32.totalorder %s86, 0
    %p337 = por %p335, %p336
    %s339 = sadd.s32 %s338, 1
    %p342 = scmp.eq.s32.totalorder %s80, 1
    %p343 = scmp.ne.s32.totalorder %s338, %s340
    %p344 = scmp.eq.s32.totalorder %s80, 0
    %p345 = por %p343, %p344
    %p346 = scmp.ne.s32.totalorder %s338, %s340
    %p347 = scmp.eq.s32.totalorder %s85, 1
    %p348 = por %p346, %p347
    %p349 = scmp.ne.s32.totalorder %s340, %s341
    %p350 = scmp.eq.s32.totalorder %s85, 0
    %p351 = por %p349, %p350
    %p352 = scmp.ne.s32.totalorder %s340, %s341
    %p353 = scmp.eq.s32.totalorder %s86, 1
    %p354 = por %p352, %p353
    %p356 = scmp.ne.s32.totalorder %s341, %s355
    %p357 = scmp.eq.s32.totalorder %s86, 0
    %p358 = por %p356, %p357
    %s360 = sadd.s32 %s359, 1
    %p363 = scmp.eq.s32.totalorder %s80, 1
    %p364 = scmp.ne.s32.totalorder %s359, %s361
    %p365 = scmp.eq.s32.totalorder %s80, 0
    %p366 = por %p364, %p365
    %p367 = scmp.ne.s32.totalorder %s359, %s361
    %p368 = scmp.eq.s32.totalorder %s85, 1
    %p369 = por %p367, %p368
    %p370 = scmp.ne.s32.totalorder %s361, %s362
    %p371 = scmp.eq.s32.totalorder %s85, 0
    %p372 = por %p370, %p371
    %p373 = scmp.ne.s32.totalorder %s361, %s362
    %p374 = scmp.eq.s32.totalorder %s86, 1
    %p375 = por %p373, %p374
    %p377 = scmp.ne.s32.totalorder %s362, %s376
    %p378 = scmp.eq.s32.totalorder %s86, 0
    %p379 = por %p377, %p378
    %s381 = sadd.s32 %s380, 1
    %p384 = scmp.eq.s32.totalorder %s80, 1
    %p385 = scmp.ne.s32.totalorder %s380, %s382
    %p386 = scmp.eq.s32.totalorder %s80, 0
    %p387 = por %p385, %p386
    %p388 = scmp.ne.s32.totalorder %s380, %s382
    %p389 = scmp.eq.s32.totalorder %s85, 1
    %p390 = por %p388, %p389
    %p391 = scmp.ne.s32.totalorder %s382, %s383
    %p392 = scmp.eq.s32.totalorder %s85, 0
    %p393 = por %p391, %p392
    %p394 = scmp.ne.s32.totalorder %s382, %s383
    %p395 = scmp.eq.s32.totalorder %s86, 1
    %p396 = por %p394, %p395
    %p398 = scmp.ne.s32.totalorder %s383, %s397
    %p399 = scmp.eq.s32.totalorder %s86, 0
    %p400 = por %p398, %p399
    %s402 = sadd.s32 %s401, 1
    %p405 = scmp.eq.s32.totalorder %s80, 1
    %p406 = scmp.ne.s32.totalorder %s401, %s403
    %p407 = scmp.eq.s32.totalorder %s80, 0
    %p408 = por %p406, %p407
    %p409 = scmp.ne.s32.totalorder %s401, %s403
    %p410 = scmp.eq.s32.totalorder %s85, 1
    %p411 = por %p409, %p410
    %p412 = scmp.ne.s32.totalorder %s403, %s404
    %p413 = scmp.eq.s32.totalorder %s85, 0
    %p414 = por %p412, %p413
    %p415 = scmp.ne.s32.totalorder %s403, %s404
    %p416 = scmp.eq.s32.totalorder %s86, 1
    %p417 = por %p415, %p416
    %p419 = scmp.ne.s32.totalorder %s404, %s418
    %p420 = scmp.eq.s32.totalorder %s86, 0
    %p421 = por %p419, %p420
    %s423 = sadd.s32 %s422, 1
    %p426 = scmp.eq.s32.totalorder %s80, 1
    %p427 = scmp.ne.s32.totalorder %s422, %s424
    %p428 = scmp.eq.s32.totalorder %s80, 0
    %p429 = por %p427, %p428
    %p430 = scmp.ne.s32.totalorder %s422, %s424
    %p431 = scmp.eq.s32.totalorder %s85, 1
    %p432 = por %p430, %p431
    %p433 = scmp.ne.s32.totalorder %s424, %s425
    %p434 = scmp.eq.s32.totalorder %s85, 0
    %p435 = por %p433, %p434
    %p436 = scmp.ne.s32.totalorder %s424, %s425
    %p437 = scmp.eq.s32.totalorder %s86, 1
    %p438 = por %p436, %p437
    %p440 = scmp.ne.s32.totalorder %s425, %s439
    %p441 = scmp.eq.s32.totalorder %s86, 0
    %p442 = por %p440, %p441
    %s444 = sadd.s32 %s443, 1
    %p447 = scmp.eq.s32.totalorder %s80, 1
    %p448 = scmp.ne.s32.totalorder %s443, %s445
    %p449 = scmp.eq.s32.totalorder %s80, 0
    %p450 = por %p448, %p449
    %p451 = scmp.ne.s32.totalorder %s443, %s445
    %p452 = scmp.eq.s32.totalorder %s85, 1
    %p453 = por %p451, %p452
    %p454 = scmp.ne.s32.totalorder %s445, %s446
    %p455 = scmp.eq.s32.totalorder %s85, 0
    %p456 = por %p454, %p455
    %p457 = scmp.ne.s32.totalorder %s445, %s446
    %p458 = scmp.eq.s32.totalorder %s86, 1
    %p459 = por %p457, %p458
    %p461 = scmp.ne.s32.totalorder %s446, %s460
    %p462 = scmp.eq.s32.totalorder %s86, 0
    %p463 = por %p461, %p462
    %s465 = sadd.s32 %s464, 1
    %p468 = scmp.eq.s32.totalorder %s80, 1
    %p469 = scmp.ne.s32.totalorder %s464, %s466
    %p470 = scmp.eq.s32.totalorder %s80, 0
    %p471 = por %p469, %p470
    %p472 = scmp.ne.s32.totalorder %s464, %s466
    %p473 = scmp.eq.s32.totalorder %s85, 1
    %p474 = por %p472, %p473
    %p475 = scmp.ne.s32.totalorder %s466, %s467
    %p476 = scmp.eq.s32.totalorder %s85, 0
    %p477 = por %p475, %p476
    %p478 = scmp.ne.s32.totalorder %s466, %s467
    %p479 = scmp.eq.s32.totalorder %s86, 1
    %p480 = por %p478, %p479
    %p482 = scmp.ne.s32.totalorder %s467, %s481
    %p483 = scmp.eq.s32.totalorder %s86, 0
    %p484 = por %p482, %p483
    %s486 = sadd.s32 %s485, 1
    %p489 = scmp.eq.s32.totalorder %s80, 1
    %p490 = scmp.ne.s32.totalorder %s485, %s487
    %p491 = scmp.eq.s32.totalorder %s80, 0
    %p492 = por %p490, %p491
    %p493 = scmp.ne.s32.totalorder %s485, %s487
    %p494 = scmp.eq.s32.totalorder %s85, 1
    %p495 = por %p493, %p494
    %p496 = scmp.ne.s32.totalorder %s487, %s488
    %p497 = scmp.eq.s32.totalorder %s85, 0
    %p498 = por %p496, %p497
    %p499 = scmp.ne.s32.totalorder %s487, %s488
    %p500 = scmp.eq.s32.totalorder %s86, 1
    %p501 = por %p499, %p500
    %p503 = scmp.ne.s32.totalorder %s488, %s502
    %p504 = scmp.eq.s32.totalorder %s86, 0
    %p505 = por %p503, %p504
    %s507 = sadd.s32 %s506, 1
    %p510 = scmp.eq.s32.totalorder %s80, 1
    %p511 = scmp.ne.s32.totalorder %s506, %s508
    %p512 = scmp.eq.s32.totalorder %s80, 0
    %p513 = por %p511, %p512
    %p514 = scmp.ne.s32.totalorder %s506, %s508
    %p515 = scmp.eq.s32.totalorder %s85, 1
    %p516 = por %p514, %p515
    %p517 = scmp.ne.s32.totalorder %s508, %s509
    %p518 = scmp.eq.s32.totalorder %s85, 0
    %p519 = por %p517, %p518
    %p520 = scmp.ne.s32.totalorder %s508, %s509
    %p521 = scmp.eq.s32.totalorder %s86, 1
    %p522 = por %p520, %p521
    %p524 = scmp.ne.s32.totalorder %s509, %s523
    %p525 = scmp.eq.s32.totalorder %s86, 0
    %p526 = por %p524, %p525
    %s528 = sadd.s32 %s527, 1
    %p531 = scmp.eq.s32.totalorder %s80, 1
    %p532 = scmp.ne.s32.totalorder %s527, %s529
    %p533 = scmp.eq.s32.totalorder %s80, 0
    %p534 = por %p532, %p533
    %p535 = scmp.ne.s32.totalorder %s527, %s529
    %p536 = scmp.eq.s32.totalorder %s85, 1
    %p537 = por %p535, %p536
    %p538 = scmp.ne.s32.totalorder %s529, %s530
    %p539 = scmp.eq.s32.totalorder %s85, 0
    %p540 = por %p538, %p539
    %p541 = scmp.ne.s32.totalorder %s529, %s530
    %p542 = scmp.eq.s32.totalorder %s86, 1
    %p543 = por %p541, %p542
    %p545 = scmp.ne.s32.totalorder %s530, %s544
    %p546 = scmp.eq.s32.totalorder %s86, 0
    %p547 = por %p545, %p546
    %s549 = sadd.s32 %s548, 1
    %p552 = scmp.eq.s32.totalorder %s80, 1
    %p553 = scmp.ne.s32.totalorder %s548, %s550
    %p554 = scmp.eq.s32.totalorder %s80, 0
    %p555 = por %p553, %p554
    %p556 = scmp.ne.s32.totalorder %s548, %s550
    %p557 = scmp.eq.s32.totalorder %s85, 1
    %p558 = por %p556, %p557
    %p559 = scmp.ne.s32.totalorder %s550, %s551
    %p560 = scmp.eq.s32.totalorder %s85, 0
    %p561 = por %p559, %p560
    %p562 = scmp.ne.s32.totalorder %s550, %s551
    %p563 = scmp.eq.s32.totalorder %s86, 1
    %p564 = por %p562, %p563
    %p566 = scmp.ne.s32.totalorder %s551, %s565
    %p567 = scmp.eq.s32.totalorder %s86, 0
    %p568 = por %p566, %p567
    %s570 = sadd.s32 %s569, 1
    %p573 = scmp.eq.s32.totalorder %s80, 1
    %p574 = scmp.ne.s32.totalorder %s569, %s571
    %p575 = scmp.eq.s32.totalorder %s80, 0
    %p576 = por %p574, %p575
    %p577 = scmp.ne.s32.totalorder %s569, %s571
    %p578 = scmp.eq.s32.totalorder %s85, 1
    %p579 = por %p577, %p578
    %p580 = scmp.ne.s32.totalorder %s571, %s572
    %p581 = scmp.eq.s32.totalorder %s85, 0
    %p582 = por %p580, %p581
    %p583 = scmp.ne.s32.totalorder %s571, %s572
    %p584 = scmp.eq.s32.totalorder %s86, 1
    %p585 = por %p583, %p584
    %p587 = scmp.ne.s32.totalorder %s572, %s586
    %p588 = scmp.eq.s32.totalorder %s86, 0
    %p589 = por %p587, %p588
    %s591 = sadd.s32 %s590, 1
    %p594 = scmp.eq.s32.totalorder %s80, 1
    %p595 = scmp.ne.s32.totalorder %s590, %s592
    %p596 = scmp.eq.s32.totalorder %s80, 0
    %p597 = por %p595, %p596
    %p598 = scmp.ne.s32.totalorder %s590, %s592
    %p599 = scmp.eq.s32.totalorder %s85, 1
    %p600 = por %p598, %p599
    %p601 = scmp.ne.s32.totalorder %s592, %s593
    %p602 = scmp.eq.s32.totalorder %s85, 0
    %p603 = por %p601, %p602
    %p604 = scmp.ne.s32.totalorder %s592, %s593
    %p605 = scmp.eq.s32.totalorder %s86, 1
    %p606 = por %p604, %p605
    %p608 = scmp.ne.s32.totalorder %s593, %s607
    %p609 = scmp.eq.s32.totalorder %s86, 0
    %p610 = por %p608, %p609
    %s612 = sadd.s32 %s611, 1
    %p615 = scmp.eq.s32.totalorder %s80, 1
    %p616 = scmp.ne.s32.totalorder %s611, %s613
    %p617 = scmp.eq.s32.totalorder %s80, 0
    %p618 = por %p616, %p617
    %p619 = scmp.ne.s32.totalorder %s611, %s613
    %p620 = scmp.eq.s32.totalorder %s85, 1
    %p621 = por %p619, %p620
    %p622 = scmp.ne.s32.totalorder %s613, %s614
    %p623 = scmp.eq.s32.totalorder %s85, 0
    %p624 = por %p622, %p623
    %p625 = scmp.ne.s32.totalorder %s613, %s614
    %p626 = scmp.eq.s32.totalorder %s86, 1
    %p627 = por %p625, %p626
    %p629 = scmp.ne.s32.totalorder %s614, %s628
    %p630 = scmp.eq.s32.totalorder %s86, 0
    %p631 = por %p629, %p630
    %s633 = sadd.s32 %s632, 1
    %p636 = scmp.eq.s32.totalorder %s80, 1
    %p637 = scmp.ne.s32.totalorder %s632, %s634
    %p638 = scmp.eq.s32.totalorder %s80, 0
    %p639 = por %p637, %p638
    %p640 = scmp.ne.s32.totalorder %s632, %s634
    %p641 = scmp.eq.s32.totalorder %s85, 1
    %p642 = por %p640, %p641
    %p643 = scmp.ne.s32.totalorder %s634, %s635
    %p644 = scmp.eq.s32.totalorder %s85, 0
    %p645 = por %p643, %p644
    %p646 = scmp.ne.s32.totalorder %s634, %s635
    %p647 = scmp.eq.s32.totalorder %s86, 1
    %p648 = por %p646, %p647
    %p650 = scmp.ne.s32.totalorder %s635, %s649
    %p651 = scmp.eq.s32.totalorder %s86, 0
    %p652 = por %p650, %p651
    %s654 = sadd.s32 %s653, 1
    %p657 = scmp.eq.s32.totalorder %s80, 1
    %p658 = scmp.ne.s32.totalorder %s653, %s655
    %p659 = scmp.eq.s32.totalorder %s80, 0
    %p660 = por %p658, %p659
    %p661 = scmp.ne.s32.totalorder %s653, %s655
    %p662 = scmp.eq.s32.totalorder %s85, 1
    %p663 = por %p661, %p662
    %p664 = scmp.ne.s32.totalorder %s655, %s656
    %p665 = scmp.eq.s32.totalorder %s85, 0
    %p666 = por %p664, %p665
    %p667 = scmp.ne.s32.totalorder %s655, %s656
    %p668 = scmp.eq.s32.totalorder %s86, 1
    %p669 = por %p667, %p668
    %p671 = scmp.ne.s32.totalorder %s656, %s670
    %p672 = scmp.eq.s32.totalorder %s86, 0
    %p673 = por %p671, %p672
    %s675 = sadd.s32 %s674, 1
    %p678 = scmp.eq.s32.totalorder %s80, 1
    %p679 = scmp.ne.s32.totalorder %s674, %s676
    %p680 = scmp.eq.s32.totalorder %s80, 0
    %p681 = por %p679, %p680
    %p682 = scmp.ne.s32.totalorder %s674, %s676
    %p683 = scmp.eq.s32.totalorder %s85, 1
    %p684 = por %p682, %p683
    %p685 = scmp.ne.s32.totalorder %s676, %s677
    %p686 = scmp.eq.s32.totalorder %s85, 0
    %p687 = por %p685, %p686
    %p688 = scmp.ne.s32.totalorder %s676, %s677
    %p689 = scmp.eq.s32.totalorder %s86, 1
    %p690 = por %p688, %p689
    %p692 = scmp.ne.s32.totalorder %s677, %s691
    %p693 = scmp.eq.s32.totalorder %s86, 0
    %p694 = por %p692, %p693
    %s696 = sadd.s32 %s695, 1
    %p699 = scmp.eq.s32.totalorder %s80, 1
    %p700 = scmp.ne.s32.totalorder %s695, %s697
    %p701 = scmp.eq.s32.totalorder %s80, 0
    %p702 = por %p700, %p701
    %p703 = scmp.ne.s32.totalorder %s695, %s697
    %p704 = scmp.eq.s32.totalorder %s85, 1
    %p705 = por %p703, %p704
    %p706 = scmp.ne.s32.totalorder %s697, %s698
    %p707 = scmp.eq.s32.totalorder %s85, 0
    %p708 = por %p706, %p707
    %p709 = scmp.ne.s32.totalorder %s697, %s698
    %p710 = scmp.eq.s32.totalorder %s86, 1
    %p711 = por %p709, %p710
    %p713 = scmp.ne.s32.totalorder %s698, %s712
    %p714 = scmp.eq.s32.totalorder %s86, 0
    %p715 = por %p713, %p714
    %s717 = sadd.s32 %s716, 1
    %p720 = scmp.eq.s32.totalorder %s80, 1
    %p721 = scmp.ne.s32.totalorder %s716, %s718
    %p722 = scmp.eq.s32.totalorder %s80, 0
    %p723 = por %p721, %p722
    %p724 = scmp.ne.s32.totalorder %s716, %s718
    %p725 = scmp.eq.s32.totalorder %s85, 1
    %p726 = por %p724, %p725
    %p727 = scmp.ne.s32.totalorder %s718, %s719
    %p728 = scmp.eq.s32.totalorder %s85, 0
    %p729 = por %p727, %p728
    %p730 = scmp.ne.s32.totalorder %s718, %s719
    %p731 = scmp.eq.s32.totalorder %s86, 1
    %p732 = por %p730, %p731
    %p734 = scmp.ne.s32.totalorder %s719, %s733
    %p735 = scmp.eq.s32.totalorder %s86, 0
    %p736 = por %p734, %p735
    %s738 = sadd.s32 %s737, 1
    %p741 = scmp.eq.s32.totalorder %s80, 1
    %p742 = scmp.ne.s32.totalorder %s737, %s739
    %p743 = scmp.eq.s32.totalorder %s80, 0
    %p744 = por %p742, %p743
    %p745 = scmp.ne.s32.totalorder %s737, %s739
    %p746 = scmp.eq.s32.totalorder %s85, 1
    %p747 = por %p745, %p746
    %p748 = scmp.ne.s32.totalorder %s739, %s740
    %p749 = scmp.eq.s32.totalorder %s85, 0
    %p750 = por %p748, %p749
    %p751 = scmp.ne.s32.totalorder %s739, %s740
    %p752 = scmp.eq.s32.totalorder %s86, 1
    %p753 = por %p751, %p752
    %p755 = scmp.ne.s32.totalorder %s740, %s754
    %p756 = scmp.eq.s32.totalorder %s86, 0
    %p757 = por %p755, %p756
    %s759 = sadd.s32 %s758, 1
    %p762 = scmp.eq.s32.totalorder %s80, 1
    %p763 = scmp.ne.s32.totalorder %s758, %s760
    %p764 = scmp.eq.s32.totalorder %s80, 0
    %p765 = por %p763, %p764
    %p766 = scmp.ne.s32.totalorder %s758, %s760
    %p767 = scmp.eq.s32.totalorder %s85, 1
    %p768 = por %p766, %p767
    %p769 = scmp.ne.s32.totalorder %s760, %s761
    %p770 = scmp.eq.s32.totalorder %s85, 0
    %p771 = por %p769, %p770
    %p772 = scmp.ne.s32.totalorder %s760, %s761
    %p773 = scmp.eq.s32.totalorder %s86, 1
    %p774 = por %p772, %p773
    %p776 = scmp.ne.s32.totalorder %s761, %s775
    %p777 = scmp.eq.s32.totalorder %s86, 0
    %p778 = por %p776, %p777
    %s780 = sadd.s32 %s779, 1
    %p783 = scmp.eq.s32.totalorder %s80, 1
    %p784 = scmp.ne.s32.totalorder %s779, %s781
    %p785 = scmp.eq.s32.totalorder %s80, 0
    %p786 = por %p784, %p785
    %p787 = scmp.ne.s32.totalorder %s779, %s781
    %p788 = scmp.eq.s32.totalorder %s85, 1
    %p789 = por %p787, %p788
    %p790 = scmp.ne.s32.totalorder %s781, %s782
    %p791 = scmp.eq.s32.totalorder %s85, 0
    %p792 = por %p790, %p791
    %p793 = scmp.ne.s32.totalorder %s781, %s782
    %p794 = scmp.eq.s32.totalorder %s86, 1
    %p795 = por %p793, %p794
    %p797 = scmp.ne.s32.totalorder %s782, %s796
    %p798 = scmp.eq.s32.totalorder %s86, 0
    %p799 = por %p797, %p798
    %s801 = sadd.s32 %s800, 1
    %p804 = scmp.eq.s32.totalorder %s80, 1
    %p805 = scmp.ne.s32.totalorder %s800, %s802
    %p806 = scmp.eq.s32.totalorder %s80, 0
    %p807 = por %p805, %p806
    %p808 = scmp.ne.s32.totalorder %s800, %s802
    %p809 = scmp.eq.s32.totalorder %s85, 1
    %p810 = por %p808, %p809
    %p811 = scmp.ne.s32.totalorder %s802, %s803
    %p812 = scmp.eq.s32.totalorder %s85, 0
    %p813 = por %p811, %p812
    %p814 = scmp.ne.s32.totalorder %s802, %s803
    %p815 = scmp.eq.s32.totalorder %s86, 1
    %p816 = por %p814, %p815
    %p818 = scmp.ne.s32.totalorder %s803, %s817
    %p819 = scmp.eq.s32.totalorder %s86, 0
    %p820 = por %p818, %p819
    %s822 = sadd.s32 %s821, 1
    %p825 = scmp.eq.s32.totalorder %s80, 1
    %p826 = scmp.ne.s32.totalorder %s821, %s823
    %p827 = scmp.eq.s32.totalorder %s80, 0
    %p828 = por %p826, %p827
    %p829 = scmp.ne.s32.totalorder %s821, %s823
    %p830 = scmp.eq.s32.totalorder %s85, 1
    %p831 = por %p829, %p830
    %p832 = scmp.ne.s32.totalorder %s823, %s824
    %p833 = scmp.eq.s32.totalorder %s85, 0
    %p834 = por %p832, %p833
    %p835 = scmp.ne.s32.totalorder %s823, %s824
    %p836 = scmp.eq.s32.totalorder %s86, 1
    %p837 = por %p835, %p836
    %p839 = scmp.ne.s32.totalorder %s824, %s838
    %p840 = scmp.eq.s32.totalorder %s86, 0
    %p841 = por %p839, %p840
    %s842 = ssub.s32 %s87, %s99
    %s843 = ssub.s32 %s88, %s95
    %s844 = sor.u32 %s842, %s843
    %p845 = scmp.eq.s32.totalorder %s844, 0
    %s847 = sadd.s32 %s846, 1
    %s848 = scalar_select %p845, %s846, %s847
    %p851 = pneg %p845
    %p852 = scmp.eq.s32.totalorder %s80, 1
    %p853 = por %p851, %p852
    %p854 = scmp.ne.s32.totalorder %s846, %s849
    %p855 = scmp.eq.s32.totalorder %s80, 0
    %p856 = por %p854, %p855
    %p857 = scmp.ne.s32.totalorder %s846, %s849
    %p858 = scmp.eq.s32.totalorder %s85, 1
    %p859 = por %p857, %p858
    %p860 = scmp.ne.s32.totalorder %s849, %s850
    %p861 = scmp.eq.s32.totalorder %s85, 0
    %p862 = por %p860, %p861
    %p863 = scmp.ne.s32.totalorder %s849, %s850
    %p864 = scmp.eq.s32.totalorder %s86, 1
    %p865 = por %p863, %p864
    %p867 = scmp.ne.s32.totalorder %s850, %s866
    %p868 = scmp.eq.s32.totalorder %s86, 0
    %p869 = por %p867, %p868
    %s870 = ssub.s32 %s87, %s99
    %p871 = scmp.eq.s32.totalorder %s870, 0
    %s873 = sadd.s32 %s872, 1
    %s874 = scalar_select %p871, %s872, %s873
    %p877 = pneg %p871
    %p878 = scmp.eq.s32.totalorder %s80, 1
    %p879 = por %p877, %p878
    %p880 = scmp.ne.s32.totalorder %s872, %s875
    %p881 = scmp.eq.s32.totalorder %s80, 0
    %p882 = por %p880, %p881
    %p883 = scmp.ne.s32.totalorder %s872, %s875
    %p884 = scmp.eq.s32.totalorder %s85, 1
    %p885 = por %p883, %p884
    %p886 = scmp.ne.s32.totalorder %s875, %s876
    %p887 = scmp.eq.s32.totalorder %s85, 0
    %p888 = por %p886, %p887
    %p889 = scmp.ne.s32.totalorder %s875, %s876
    %p890 = scmp.eq.s32.totalorder %s86, 1
    %p891 = por %p889, %p890
    %p893 = scmp.ne.s32.totalorder %s876, %s892
    %p894 = scmp.eq.s32.totalorder %s86, 0
    %p895 = por %p893, %p894
    %p896 = scmp.le.s32.totalorder 1, %s80
    %p897 = scmp.lt.s32.totalorder %s80, 3
    %p898 = pnand %p896, %p897
    %p899 = pneg %p898
    // Predicated region
    $region9: #{_lambda_.1} parent=5 // pred_check
      _
    $region10: #{_lambda_.1} parent=5 // pred_check_branch
      %901 = sbr.rel (%p898) target = $region12
    $region11: #{_lambda_.1} parent=5 // pred_region
      %s902 = ssub.s32 %s80, 1
      // Predicated region
      $region13: #{_lambda_.1} parent=11 // pred_check
        %p903 = pneg %p225
      $region14: #{_lambda_.1} parent=11 // pred_check_branch
        %905 = sbr.rel (%p903) target = $region16
      $region15: #{_lambda_.1} parent=11 // pred_region
        _
      $region16: #{_lambda_.1} parent=11 // pred_fallthru
        _
      // Predicated region
      $region17: #{_lambda_.1} parent=11 // pred_check
        %p906 = pneg %p246
      $region18: #{_lambda_.1} parent=11 // pred_check_branch
        %908 = sbr.rel (%p906) target = $region20
      $region19: #{_lambda_.1} parent=11 // pred_region
        _
      $region20: #{_lambda_.1} parent=11 // pred_fallthru
        _
      // Predicated region
      $region21: #{_lambda_.1} parent=11 // pred_check
        %p909 = pneg %p267
      $region22: #{_lambda_.1} parent=11 // pred_check_branch
        %911 = sbr.rel (%p909) target = $region24
      $region23: #{_lambda_.1} parent=11 // pred_region
        _
      $region24: #{_lambda_.1} parent=11 // pred_fallthru
        _
      // Predicated region
      $region25: #{_lambda_.1} parent=11 // pred_check
        %p912 = pneg %p288
      $region26: #{_lambda_.1} parent=11 // pred_check_branch
        %914 = sbr.rel (%p912) target = $region28
      $region27: #{_lambda_.1} parent=11 // pred_region
        _
      $region28: #{_lambda_.1} parent=11 // pred_fallthru
        _
      // Predicated region
      $region29: #{_lambda_.1} parent=11 // pred_check
        %p915 = pneg %p309
      $region30: #{_lambda_.1} parent=11 // pred_check_branch
        %917 = sbr.rel (%p915) target = $region32
      $region31: #{_lambda_.1} parent=11 // pred_region
        _
      $region32: #{_lambda_.1} parent=11 // pred_fallthru
        _
      // Predicated region
      $region33: #{_lambda_.1} parent=11 // pred_check
        %p918 = pneg %p330
      $region34: #{_lambda_.1} parent=11 // pred_check_branch
        %920 = sbr.rel (%p918) target = $region36
      $region35: #{_lambda_.1} parent=11 // pred_region
        _
      $region36: #{_lambda_.1} parent=11 // pred_fallthru
        _
      // Predicated region
      $region37: #{_lambda_.1} parent=11 // pred_check
        %p921 = pneg %p351
      $region38: #{_lambda_.1} parent=11 // pred_check_branch
        %923 = sbr.rel (%p921) target = $region40
      $region39: #{_lambda_.1} parent=11 // pred_region
        _
      $region40: #{_lambda_.1} parent=11 // pred_fallthru
        _
      // Predicated region
      $region41: #{_lambda_.1} parent=11 // pred_check
        %p924 = pneg %p372
      $region42: #{_lambda_.1} parent=11 // pred_check_branch
        %926 = sbr.rel (%p924) target = $region44
      $region43: #{_lambda_.1} parent=11 // pred_region
        _
      $region44: #{_lambda_.1} parent=11 // pred_fallthru
        _
      // Predicated region
      $region45: #{_lambda_.1} parent=11 // pred_check
        %p927 = pneg %p393
      $region46: #{_lambda_.1} parent=11 // pred_check_branch
        %929 = sbr.rel (%p927) target = $region48
      $region47: #{_lambda_.1} parent=11 // pred_region
        _
      $region48: #{_lambda_.1} parent=11 // pred_fallthru
        _
      // Predicated region
      $region49: #{_lambda_.1} parent=11 // pred_check
        %p930 = pneg %p414
      $region50: #{_lambda_.1} parent=11 // pred_check_branch
        %932 = sbr.rel (%p930) target = $region52
      $region51: #{_lambda_.1} parent=11 // pred_region
        _
      $region52: #{_lambda_.1} parent=11 // pred_fallthru
        _
      // Predicated region
      $region53: #{_lambda_.1} parent=11 // pred_check
        %p933 = pneg %p435
      $region54: #{_lambda_.1} parent=11 // pred_check_branch
        %935 = sbr.rel (%p933) target = $region56
      $region55: #{_lambda_.1} parent=11 // pred_region
        _
      $region56: #{_lambda_.1} parent=11 // pred_fallthru
        _
      // Predicated region
      $region57: #{_lambda_.1} parent=11 // pred_check
        %p936 = pneg %p456
      $region58: #{_lambda_.1} parent=11 // pred_check_branch
        %938 = sbr.rel (%p936) target = $region60
      $region59: #{_lambda_.1} parent=11 // pred_region
        _
      $region60: #{_lambda_.1} parent=11 // pred_fallthru
        _
      // Predicated region
      $region61: #{_lambda_.1} parent=11 // pred_check
        %p939 = pneg %p477
      $region62: #{_lambda_.1} parent=11 // pred_check_branch
        %941 = sbr.rel (%p939) target = $region64
      $region63: #{_lambda_.1} parent=11 // pred_region
        _
      $region64: #{_lambda_.1} parent=11 // pred_fallthru
        _
      // Predicated region
      $region65: #{_lambda_.1} parent=11 // pred_check
        %p942 = pneg %p498
      $region66: #{_lambda_.1} parent=11 // pred_check_branch
        %944 = sbr.rel (%p942) target = $region68
      $region67: #{_lambda_.1} parent=11 // pred_region
        _
      $region68: #{_lambda_.1} parent=11 // pred_fallthru
        _
      // Predicated region
      $region69: #{_lambda_.1} parent=11 // pred_check
        %p945 = pneg %p519
      $region70: #{_lambda_.1} parent=11 // pred_check_branch
        %947 = sbr.rel (%p945) target = $region72
      $region71: #{_lambda_.1} parent=11 // pred_region
        _
      $region72: #{_lambda_.1} parent=11 // pred_fallthru
        _
      // Predicated region
      $region73: #{_lambda_.1} parent=11 // pred_check
        %p948 = pneg %p540
      $region74: #{_lambda_.1} parent=11 // pred_check_branch
        %950 = sbr.rel (%p948) target = $region76
      $region75: #{_lambda_.1} parent=11 // pred_region
        _
      $region76: #{_lambda_.1} parent=11 // pred_fallthru
        _
      // Predicated region
      $region77: #{_lambda_.1} parent=11 // pred_check
        %p951 = pneg %p561
      $region78: #{_lambda_.1} parent=11 // pred_check_branch
        %953 = sbr.rel (%p951) target = $region80
      $region79: #{_lambda_.1} parent=11 // pred_region
        _
      $region80: #{_lambda_.1} parent=11 // pred_fallthru
        _
      // Predicated region
      $region81: #{_lambda_.1} parent=11 // pred_check
        %p954 = pneg %p582
      $region82: #{_lambda_.1} parent=11 // pred_check_branch
        %956 = sbr.rel (%p954) target = $region84
      $region83: #{_lambda_.1} parent=11 // pred_region
        _
      $region84: #{_lambda_.1} parent=11 // pred_fallthru
        _
      // Predicated region
      $region85: #{_lambda_.1} parent=11 // pred_check
        %p957 = pneg %p603
      $region86: #{_lambda_.1} parent=11 // pred_check_branch
        %959 = sbr.rel (%p957) target = $region88
      $region87: #{_lambda_.1} parent=11 // pred_region
        _
      $region88: #{_lambda_.1} parent=11 // pred_fallthru
        _
      // Predicated region
      $region89: #{_lambda_.1} parent=11 // pred_check
        %p960 = pneg %p624
      $region90: #{_lambda_.1} parent=11 // pred_check_branch
        %962 = sbr.rel (%p960) target = $region92
      $region91: #{_lambda_.1} parent=11 // pred_region
        _
      $region92: #{_lambda_.1} parent=11 // pred_fallthru
        _
      // Predicated region
      $region93: #{_lambda_.1} parent=11 // pred_check
        %p963 = pneg %p645
      $region94: #{_lambda_.1} parent=11 // pred_check_branch
        %965 = sbr.rel (%p963) target = $region96
      $region95: #{_lambda_.1} parent=11 // pred_region
        _
      $region96: #{_lambda_.1} parent=11 // pred_fallthru
        _
      // Predicated region
      $region97: #{_lambda_.1} parent=11 // pred_check
        %p966 = pneg %p666
      $region98: #{_lambda_.1} parent=11 // pred_check_branch
        %968 = sbr.rel (%p966) target = $region100
      $region99: #{_lambda_.1} parent=11 // pred_region
        _
      $region100: #{_lambda_.1} parent=11 // pred_fallthru
        _
      // Predicated region
      $region101: #{_lambda_.1} parent=11 // pred_check
        %p969 = pneg %p687
      $region102: #{_lambda_.1} parent=11 // pred_check_branch
        %971 = sbr.rel (%p969) target = $region104
      $region103: #{_lambda_.1} parent=11 // pred_region
        _
      $region104: #{_lambda_.1} parent=11 // pred_fallthru
        _
      // Predicated region
      $region105: #{_lambda_.1} parent=11 // pred_check
        %p972 = pneg %p708
      $region106: #{_lambda_.1} parent=11 // pred_check_branch
        %974 = sbr.rel (%p972) target = $region108
      $region107: #{_lambda_.1} parent=11 // pred_region
        _
      $region108: #{_lambda_.1} parent=11 // pred_fallthru
        _
      // Predicated region
      $region109: #{_lambda_.1} parent=11 // pred_check
        %p975 = pneg %p729
      $region110: #{_lambda_.1} parent=11 // pred_check_branch
        %977 = sbr.rel (%p975) target = $region112
      $region111: #{_lambda_.1} parent=11 // pred_region
        _
      $region112: #{_lambda_.1} parent=11 // pred_fallthru
        _
      // Predicated region
      $region113: #{_lambda_.1} parent=11 // pred_check
        %p978 = pneg %p750
      $region114: #{_lambda_.1} parent=11 // pred_check_branch
        %980 = sbr.rel (%p978) target = $region116
      $region115: #{_lambda_.1} parent=11 // pred_region
        _
      $region116: #{_lambda_.1} parent=11 // pred_fallthru
        _
      // Predicated region
      $region117: #{_lambda_.1} parent=11 // pred_check
        %p981 = pneg %p771
      $region118: #{_lambda_.1} parent=11 // pred_check_branch
        %983 = sbr.rel (%p981) target = $region120
      $region119: #{_lambda_.1} parent=11 // pred_region
        _
      $region120: #{_lambda_.1} parent=11 // pred_fallthru
        _
      // Predicated region
      $region121: #{_lambda_.1} parent=11 // pred_check
        %p984 = pneg %p792
      $region122: #{_lambda_.1} parent=11 // pred_check_branch
        %986 = sbr.rel (%p984) target = $region124
      $region123: #{_lambda_.1} parent=11 // pred_region
        _
      $region124: #{_lambda_.1} parent=11 // pred_fallthru
        _
      // Predicated region
      $region125: #{_lambda_.1} parent=11 // pred_check
        %p987 = pneg %p813
      $region126: #{_lambda_.1} parent=11 // pred_check_branch
        %989 = sbr.rel (%p987) target = $region128
      $region127: #{_lambda_.1} parent=11 // pred_region
        _
      $region128: #{_lambda_.1} parent=11 // pred_fallthru
        _
      // Predicated region
      $region129: #{_lambda_.1} parent=11 // pred_check
        %p990 = pneg %p834
      $region130: #{_lambda_.1} parent=11 // pred_check_branch
        %992 = sbr.rel (%p990) target = $region132
      $region131: #{_lambda_.1} parent=11 // pred_region
        _
      $region132: #{_lambda_.1} parent=11 // pred_fallthru
        _
    $region12: #{_lambda_.1} parent=5 // pred_fallthru
      _
    %p993 = scmp.lt.s32.totalorder %s80, 2
    // Predicated region
    $region133: #{_lambda_.1} parent=5 // pred_check
      %p994 = pneg %p993
    $region134: #{_lambda_.1} parent=5 // pred_check_branch
      %996 = sbr.rel (%p994) target = $region136
    $region135: #{_lambda_.1} parent=5 // pred_region
      // Predicated region
      $region137: #{_lambda_.1} parent=135 // pred_check
        %p997 = pneg %p114
      $region138: #{_lambda_.1} parent=135 // pred_check_branch
        %999 = sbr.rel (%p997) target = $region140
      $region139: #{_lambda_.1} parent=135 // pred_region
        %s1000 = smul.u32 2, %s88
        %p1001 = scmp.lt.s32.totalorder %s87, 1
        %s1002 = scalar_select %p1001, %s87, 1
        %p1003 = scmp.lt.s32.totalorder %s1000, 1
        %s1004 = scalar_select %p1003, %s1000, 1
        %s1005 = smul.addr %s1002, 2
        %s1006 = sadd.s32 %s1004, %s1005
        %s1007 = smul.addr %s1006, 2
        %s1008 = scalar_lea.vmem %s1, %s1007
        %s1009 = smul.u32 2, %s88
      $region140: #{_lambda_.1} parent=135 // pred_fallthru
        _
      // Predicated region
      $region141: #{_lambda_.1} parent=135 // pred_check
        %p1010 = pneg %p142
      $region142: #{_lambda_.1} parent=135 // pred_check_branch
        %1012 = sbr.rel (%p1010) target = $region144
      $region143: #{_lambda_.1} parent=135 // pred_region
        %s1013 = smul.u32 2, %s88
        %p1014 = scmp.lt.s32.totalorder %s87, 1
        %s1015 = scalar_select %p1014, %s87, 1
        %p1016 = scmp.lt.s32.totalorder %s1013, 1
        %s1017 = scalar_select %p1016, %s1013, 1
        %s1018 = smul.addr %s1015, 2
        %s1019 = sadd.s32 %s1017, %s1018
        %s1020 = smul.addr %s1019, 2
        %s1021 = scalar_lea.vmem %s3, %s1020
        %s1022 = smul.u32 2, %s88
      $region144: #{_lambda_.1} parent=135 // pred_fallthru
        _
      // Predicated region
      $region145: #{_lambda_.1} parent=135 // pred_check
        %p1023 = pneg %p170
      $region146: #{_lambda_.1} parent=135 // pred_check_branch
        %1025 = sbr.rel (%p1023) target = $region148
      $region147: #{_lambda_.1} parent=135 // pred_region
        %s1026 = smul.u32 2, %s88
        %p1027 = scmp.lt.s32.totalorder %s87, 1
        %s1028 = scalar_select %p1027, %s87, 1
        %p1029 = scmp.lt.s32.totalorder %s1026, 1
        %s1030 = scalar_select %p1029, %s1026, 1
        %s1031 = smul.addr %s1028, 2
        %s1032 = sadd.s32 %s1030, %s1031
        %s1033 = smul.addr %s1032, 2
        %s1034 = scalar_lea.vmem %s5, %s1033
        %s1035 = smul.u32 2, %s88
      $region148: #{_lambda_.1} parent=135 // pred_fallthru
        _
      // Predicated region
      $region149: #{_lambda_.1} parent=135 // pred_check
        %p1036 = pneg %p198
      $region150: #{_lambda_.1} parent=135 // pred_check_branch
        %1038 = sbr.rel (%p1036) target = $region152
      $region151: #{_lambda_.1} parent=135 // pred_region
        %s1039 = smul.u32 2, %s88
        %p1040 = scmp.lt.s32.totalorder %s87, 1
        %s1041 = scalar_select %p1040, %s87, 1
        %p1042 = scmp.lt.s32.totalorder %s1039, 1
        %s1043 = scalar_select %p1042, %s1039, 1
        %s1044 = smul.addr %s1041, 2
        %s1045 = sadd.s32 %s1043, %s1044
        %s1046 = smul.addr %s1045, 2
        %s1047 = scalar_lea.vmem %s7, %s1046
        %s1048 = smul.u32 2, %s88
      $region152: #{_lambda_.1} parent=135 // pred_fallthru
        _
    $region136: #{_lambda_.1} parent=5 // pred_fallthru
      _
    %p1049 = scmp.le.s32.totalorder 1, %s80
    %p1050 = scmp.lt.s32.totalorder %s80, 3
    %p1051 = pnand %p1049, %p1050
    %p1052 = pneg %p1051
    // Predicated region
    $region153: #{_lambda_.1} parent=5 // pred_check
      _
    $region154: #{_lambda_.1} parent=5 // pred_check_branch
      %1054 = sbr.rel (%p1051) target = $region156
    $region155: #{_lambda_.1} parent=5 // pred_region
      %s1055 = ssub.s32 %s80, 1
      %s1056 = smul.u32 2, %s90
      %p1057 = scmp.lt.s32.totalorder %s89, 1
      %s1058 = scalar_select %p1057, %s89, 1
      %p1059 = scmp.lt.s32.totalorder %s1056, 1
      %s1060 = scalar_select %p1059, %s1056, 1
      %s1061 = smul.addr %s1058, 2
      %s1062 = sadd.s32 %s1060, %s1061
      %s1063 = smul.addr %s1062, 2
      %s1064 = scalar_lea.vmem %s1, %s1063
      %p1065 = pneg %p120
      %p1066 = pneg %p117
      %s1067 = smul.u32 2, %s90
      %p1068 = scmp.lt.s32.totalorder %s89, 1
      %s1069 = scalar_select %p1068, %s89, 1
      %p1070 = scmp.lt.s32.totalorder %s1067, 1
      %s1071 = scalar_select %p1070, %s1067, 1
      %s1072 = smul.addr %s1069, 2
      %s1073 = sadd.s32 %s1071, %s1072
      %s1074 = smul.addr %s1073, 2
      %s1075 = scalar_lea.vmem %s3, %s1074
      %p1076 = pneg %p148
      %p1077 = pneg %p145
      %s1078 = smul.u32 2, %s90
      %p1079 = scmp.lt.s32.totalorder %s89, 1
      %s1080 = scalar_select %p1079, %s89, 1
      %p1081 = scmp.lt.s32.totalorder %s1078, 1
      %s1082 = scalar_select %p1081, %s1078, 1
      %s1083 = smul.addr %s1080, 2
      %s1084 = sadd.s32 %s1082, %s1083
      %s1085 = smul.addr %s1084, 2
      %s1086 = scalar_lea.vmem %s5, %s1085
      %p1087 = pneg %p176
      %p1088 = pneg %p173
      %s1089 = smul.u32 2, %s90
      %p1090 = scmp.lt.s32.totalorder %s89, 1
      %s1091 = scalar_select %p1090, %s89, 1
      %p1092 = scmp.lt.s32.totalorder %s1089, 1
      %s1093 = scalar_select %p1092, %s1089, 1
      %s1094 = smul.addr %s1091, 2
      %s1095 = sadd.s32 %s1093, %s1094
      %s1096 = smul.addr %s1095, 2
      %s1097 = scalar_lea.vmem %s7, %s1096
      %p1098 = pneg %p204
      %p1099 = pneg %p201
      %p1100 = pneg %p225
      %p1101 = pneg %p222
      %p1102 = pneg %p246
      %p1103 = pneg %p243
      %p1104 = pneg %p267
      %p1105 = pneg %p264
      %p1106 = pneg %p288
      %p1107 = pneg %p285
      %p1108 = pneg %p309
      %p1109 = pneg %p306
      %p1110 = pneg %p330
      %p1111 = pneg %p327
      %p1112 = pneg %p351
      %p1113 = pneg %p348
      %p1114 = pneg %p372
      %p1115 = pneg %p369
      %p1116 = pneg %p393
      %p1117 = pneg %p390
      %p1118 = pneg %p414
      %p1119 = pneg %p411
      %p1120 = pneg %p435
      %p1121 = pneg %p432
      %p1122 = pneg %p456
      %p1123 = pneg %p453
      %p1124 = pneg %p477
      %p1125 = pneg %p474
      %p1126 = pneg %p498
      %p1127 = pneg %p495
      %p1128 = pneg %p519
      %p1129 = pneg %p516
      %p1130 = pneg %p540
      %p1131 = pneg %p537
      %p1132 = pneg %p561
      %p1133 = pneg %p558
      %p1134 = pneg %p582
      %p1135 = pneg %p579
      %p1136 = pneg %p603
      %p1137 = pneg %p600
      %p1138 = pneg %p624
      %p1139 = pneg %p621
      %p1140 = pneg %p645
      %p1141 = pneg %p642
      %p1142 = pneg %p666
      %p1143 = pneg %p663
      %p1144 = pneg %p687
      %p1145 = pneg %p684
      %p1146 = pneg %p708
      %p1147 = pneg %p705
      %p1148 = pneg %p729
      %p1149 = pneg %p726
      %p1150 = pneg %p750
      %p1151 = pneg %p747
      %p1152 = pneg %p771
      %p1153 = pneg %p768
      %p1154 = pneg %p792
      %p1155 = pneg %p789
      %p1156 = pneg %p813
      %p1157 = pneg %p810
      %p1158 = pneg %p834
      %p1159 = pneg %p831
      %p1160 = pneg %p862
      %p1161 = pneg %p859
      %s1162 = smul.u32 2, %s90
      %p1163 = scmp.lt.s32.totalorder %s89, 1
      %s1164 = scalar_select %p1163, %s89, 1
      %p1165 = scmp.lt.s32.totalorder %s1162, 1
      %s1166 = scalar_select %p1165, %s1162, 1
      %s1167 = smul.addr %s1164, 2
      %s1168 = sadd.s32 %s1166, %s1167
      %s1169 = smul.addr %s1168, 4
      %s1170 = scalar_lea.vmem %s69, %s1169
      %p1171 = pneg %p888
      %p1172 = pneg %p885
      %p1173 = scmp.lt.s32.totalorder %s89, 1
      %s1174 = scalar_select %p1173, %s89, 1
      %s1175 = smul.addr %s1174, 8
      %s1176 = scalar_lea.vmem %s71, %s1175
      %s1177 = smul.u32 2, %s90
      %p1178 = scmp.lt.s32.totalorder %s89, 1
      %s1179 = scalar_select %p1178, %s89, 1
      %p1180 = scmp.lt.s32.totalorder %s1177, 1
      %s1181 = scalar_select %p1180, %s1177, 1
      %s1182 = smul.addr %s1179, 2
      %s1183 = sadd.s32 %s1181, %s1182
      %s1184 = smul.addr %s1183, 2
      %s1185 = scalar_lea.vmem %s1, %s1184
      %s1186 = smul.u32 2, %s90
      %s1187 = smul.u32 2, %s90
      %p1188 = scmp.lt.s32.totalorder %s89, 1
      %s1189 = scalar_select %p1188, %s89, 1
      %p1190 = scmp.lt.s32.totalorder %s1187, 1
      %s1191 = scalar_select %p1190, %s1187, 1
      %s1192 = smul.addr %s1189, 2
      %s1193 = sadd.s32 %s1191, %s1192
      %s1194 = smul.addr %s1193, 2
      %s1195 = scalar_lea.vmem %s3, %s1194
      %s1196 = smul.u32 2, %s90
      %s1197 = smul.u32 2, %s90
      %p1198 = scmp.lt.s32.totalorder %s89, 1
      %s1199 = scalar_select %p1198, %s89, 1
      %p1200 = scmp.lt.s32.totalorder %s1197, 1
      %s1201 = scalar_select %p1200, %s1197, 1
      %s1202 = smul.addr %s1199, 2
      %s1203 = sadd.s32 %s1201, %s1202
      %s1204 = smul.addr %s1203, 2
      %s1205 = scalar_lea.vmem %s5, %s1204
      %s1206 = smul.u32 2, %s90
      %s1207 = smul.u32 2, %s90
      %p1208 = scmp.lt.s32.totalorder %s89, 1
      %s1209 = scalar_select %p1208, %s89, 1
      %p1210 = scmp.lt.s32.totalorder %s1207, 1
      %s1211 = scalar_select %p1210, %s1207, 1
      %s1212 = smul.addr %s1209, 2
      %s1213 = sadd.s32 %s1211, %s1212
      %s1214 = smul.addr %s1213, 2
      %s1215 = scalar_lea.vmem %s7, %s1214
      %s1216 = smul.u32 2, %s90
      %s1217 = smul.u32 2, %s90
      %p1218 = scmp.lt.s32.totalorder %s89, 1
      %s1219 = scalar_select %p1218, %s89, 1
      %p1220 = scmp.lt.s32.totalorder %s1217, 1
      %s1221 = scalar_select %p1220, %s1217, 1
      %s1222 = smul.addr %s1219, 2
      %s1223 = sadd.s32 %s1221, %s1222
      %s1224 = smul.addr %s1223, 4
      %s1225 = scalar_lea.vmem %s69, %s1224
      %s1226 = smul.u32 2, %s90
      %p1227 = scmp.lt.s32.totalorder %s89, 1
      %s1228 = scalar_select %p1227, %s89, 1
      %s1229 = smul.addr %s1228, 8
      %s1230 = scalar_lea.vmem %s71, %s1229
      %v1232 = vld [vmem:[%s9] sm:$0xf]
      %v1233 = vld [vmem:[%s1185] sm:$0xf]
      %v1234 = vld [vmem:[%s11] sm:$0xff]
      %1236 = vset.pattern.permute.xlu0 0
      %1237 = vperm.xlu0 %1236, %v1234
      %v1238 = vpop.permute.xlu0 %1237
      %v1242 = vunpack.c.l.s4 1983009808
      %v1243 = vunpack.c.0.s8 %v1242
      %v1244 = vlaneseq
      %v1245 = vshrl.u32 %v1244, 7
      %v1246 = vsub.s32 %v1243, %v1245
      %v1247 = vrot.slane %v1233, %v1246
      %v1248 = vcombine.high %v1247, %v1247
      %vm1249 = vcmask 23552
      %v1251 = vsel %vm1249, %v1232, 0
      %vm1253 = vcmask 1040384
      %vm1254 = vcmask 1041408
      %v1255 = vsel %vm1253, 4294967295, 65535
      %v1256 = vsel %vm1254, %v1255, 0
      %v1258 = vand.u32 %v1247, %v1256
      %v1261 = vand.u32 %v1248, %v1256
      %1263 = vmatprep.subr.bf16.mxu0 %v1261
      %1264 = vmatpush1.bf16.msra.mxu0 %v1258
      %1265 = vmatprep.subr.bf16.mxu0 0
      %1266 = vmatpush1.bf16.msra.mxu0 0
      %1267 = vmatprep.subr.bf16.mxu0 0
      %1268 = vmatpush1.bf16.msra.mxu0 0
      %1269 = vmatprep.subr.bf16.mxu0 0
      %1270 = vmatpush1.bf16.msra.mxu0 0
      %1271 = vmatprep.subr.bf16.mxu0 0
      %1272 = vmatpush1.bf16.msra.mxu0 0
      %1273 = vmatprep.subr.bf16.mxu0 0
      %1274 = vmatpush1.bf16.msra.mxu0 0
      %1275 = vmatprep.subr.bf16.mxu0 0
      %1276 = vmatpush1.bf16.msra.mxu0 0
      %1277 = vmatprep.subr.bf16.mxu0 0
      %1278 = vmatpush1.bf16.msra.mxu0 0
      %1279 = vmatprep.subr.bf16.mxu0 0
      %1280 = vmatpush1.bf16.msra.mxu0 0
      %1281 = vmatprep.subr.bf16.mxu0 0
      %1282 = vmatpush1.bf16.msra.mxu0 0
      %1283 = vmatprep.subr.bf16.mxu0 0
      %1284 = vmatpush1.bf16.msra.mxu0 0
      %1285 = vmatprep.subr.bf16.mxu0 0
      %1286 = vmatpush1.bf16.msra.mxu0 0
      %1287 = vmatprep.subr.bf16.mxu0 0
      %1288 = vmatpush1.bf16.msra.mxu0 0
      %1289 = vmatprep.subr.bf16.mxu0 0
      %1290 = vmatpush1.bf16.msra.mxu0 0
      %1291 = vmatprep.subr.bf16.mxu0 0
      %1292 = vmatpush1.bf16.msra.mxu0 0
      %1293 = vmatprep.subr.bf16.mxu0 0
      %1294 = vmatpush1.bf16.msra.mxu0 0
      %1295 = vmatprep.mubr.bf16.mxu0 0
      %1296 = vmatmul.mubr.bf16.gmra.mrb[0].mxu0 %v1251
      %v1297 = vpop.f32.mrb[0].mxu0
      %v1298 = vadd.f32 %v1238, %v1297
      %v1299 = vpop.f32.mrb[0].mxu0
      %v1300 = vadd.f32 %v1238, %v1299
      %v1301 = vpop.f32.mrb[0].mxu0
      %v1302 = vpop.f32.mrb[0].mxu0
      %1303 = vdwg.mxu0
      %v1304 = vmax.f32 %v1298, 0.0
      %v1305 = vmax.f32 %v1300, 0.0
      %v1306 = vld [vmem:[%s13] sm:$0xf]
      %v1307 = vpack.c.bf16 %v1304, %v1304
      %v1308 = vpack.c.bf16 %v1305, %v1305
      %v1309 = vld [vmem:[%s15] sm:$0xff]
      %1311 = vset.pattern.permute.xlu0 0
      %1312 = vperm.xlu0 %1311, %v1309
      %v1313 = vpop.permute.xlu0 %1312
      %vm1315 = vcmask 64512
      %v1317 = vsel %vm1315, %v1306, 0
      %vm1319 = vcmask 1043456
      %v1321 = vsel %vm1319, %v1307, 0
      %v1324 = vsel %vm1319, %v1308, 0
      %1326 = vmatprep.subr.bf16.mxu0 %v1324
      %1327 = vmatpush1.bf16.msra.mxu0 %v1321
      %1328 = vmatprep.subr.bf16.mxu0 0
      %1329 = vmatpush1.bf16.msra.mxu0 0
      %1330 = vmatprep.subr.bf16.mxu0 0
      %1331 = vmatpush1.bf16.msra.mxu0 0
      %1332 = vmatprep.subr.bf16.mxu0 0
      %1333 = vmatpush1.bf16.msra.mxu0 0
      %1334 = vmatprep.subr.bf16.mxu0 0
      %1335 = vmatpush1.bf16.msra.mxu0 0
      %1336 = vmatprep.subr.bf16.mxu0 0
      %1337 = vmatpush1.bf16.msra.mxu0 0
      %1338 = vmatprep.subr.bf16.mxu0 0
      %1339 = vmatpush1.bf16.msra.mxu0 0
      %1340 = vmatprep.subr.bf16.mxu0 0
      %1341 = vmatpush1.bf16.msra.mxu0 0
      %1342 = vmatprep.subr.bf16.mxu0 0
      %1343 = vmatpush1.bf16.msra.mxu0 0
      %1344 = vmatprep.subr.bf16.mxu0 0
      %1345 = vmatpush1.bf16.msra.mxu0 0
      %1346 = vmatprep.subr.bf16.mxu0 0
      %1347 = vmatpush1.bf16.msra.mxu0 0
      %1348 = vmatprep.subr.bf16.mxu0 0
      %1349 = vmatpush1.bf16.msra.mxu0 0
      %1350 = vmatprep.subr.bf16.mxu0 0
      %1351 = vmatpush1.bf16.msra.mxu0 0
      %1352 = vmatprep.subr.bf16.mxu0 0
      %1353 = vmatpush1.bf16.msra.mxu0 0
      %1354 = vmatprep.subr.bf16.mxu0 0
      %1355 = vmatpush1.bf16.msra.mxu0 0
      %1356 = vmatprep.subr.bf16.mxu0 0
      %1357 = vmatpush1.bf16.msra.mxu0 0
      %1358 = vmatprep.mubr.bf16.mxu0 0
      %1359 = vmatmul.mubr.bf16.gmra.mrb[0].mxu0 %v1317
      %v1360 = vpop.f32.mrb[0].mxu0
      %v1361 = vadd.f32 %v1313, %v1360
      %v1362 = vpop.f32.mrb[0].mxu0
      %v1363 = vadd.f32 %v1313, %v1362
      %v1364 = vpop.f32.mrb[0].mxu0
      %v1365 = vpop.f32.mrb[0].mxu0
      %1366 = vdwg.mxu0
      %v1367 = vmax.f32 %v1361, 0.0
      %v1368 = vmax.f32 %v1363, 0.0
      %v1369 = vld [vmem:[%s17] sm:$0xf]
      %v1370 = vld [vmem:[%s17 + $0x4] sm:$0xf]
      %v1371 = vpack.c.bf16 %v1367, %v1367
      %v1372 = vpack.c.bf16 %v1368, %v1368
      %v1373 = vld [vmem:[%s19] sm:$0xff]
      %v1374 = vld [vmem:[%s19 + $0x8] sm:$0xff]
      %1376 = vset.pattern.permute.xlu0 0
      %1377 = vperm.xlu0 %1376, %v1373
      %v1378 = vpop.permute.xlu0 %1377
      %1381 = vset.pattern.permute.xlu0 0
      %1382 = vperm.xlu0 %1381, %v1374
      %v1383 = vpop.permute.xlu0 %1382
      %v1387 = vunpack.c.l.b16 %v1369
      %v1388 = vunpack.c.l.b16 %v1370
      %v1389 = vpack.c.b16 %v1388, %v1387
      %v1391 = vsel %vm1315, %v1389, 0
      %v1394 = vsel %vm1319, %v1371, 0
      %v1397 = vsel %vm1319, %v1372, 0
      %1399 = vmatprep.subr.bf16.mxu0 %v1397
      %1400 = vmatpush1.bf16.msra.mxu0 %v1394
      %1401 = vmatprep.subr.bf16.mxu0 0
      %1402 = vmatpush1.bf16.msra.mxu0 0
      %1403 = vmatprep.subr.bf16.mxu0 0
      %1404 = vmatpush1.bf16.msra.mxu0 0
      %1405 = vmatprep.subr.bf16.mxu0 0
      %1406 = vmatpush1.bf16.msra.mxu0 0
      %1407 = vmatprep.subr.bf16.mxu0 0
      %1408 = vmatpush1.bf16.msra.mxu0 0
      %1409 = vmatprep.subr.bf16.mxu0 0
      %1410 = vmatpush1.bf16.msra.mxu0 0
      %1411 = vmatprep.subr.bf16.mxu0 0
      %1412 = vmatpush1.bf16.msra.mxu0 0
      %1413 = vmatprep.subr.bf16.mxu0 0
      %1414 = vmatpush1.bf16.msra.mxu0 0
      %1415 = vmatprep.subr.bf16.mxu0 0
      %1416 = vmatpush1.bf16.msra.mxu0 0
      %1417 = vmatprep.subr.bf16.mxu0 0
      %1418 = vmatpush1.bf16.msra.mxu0 0
      %1419 = vmatprep.subr.bf16.mxu0 0
      %1420 = vmatpush1.bf16.msra.mxu0 0
      %1421 = vmatprep.subr.bf16.mxu0 0
      %1422 = vmatpush1.bf16.msra.mxu0 0
      %1423 = vmatprep.subr.bf16.mxu0 0
      %1424 = vmatpush1.bf16.msra.mxu0 0
      %1425 = vmatprep.subr.bf16.mxu0 0
      %1426 = vmatpush1.bf16.msra.mxu0 0
      %1427 = vmatprep.subr.bf16.mxu0 0
      %1428 = vmatpush1.bf16.msra.mxu0 0
      %1429 = vmatprep.subr.bf16.mxu0 0
      %1430 = vmatpush1.bf16.msra.mxu0 0
      %1431 = vmatprep.mubr.bf16.mxu0 0
      %1432 = vmatmul.mubr.bf16.gmra.mrb[0].mxu0 %v1391
      %v1433 = vpop.f32.mrb[0].mxu0
      %v1434 = vadd.f32 %v1378, %v1433
      %v1435 = vpop.f32.mrb[0].mxu0
      %v1436 = vadd.f32 %v1378, %v1435
      %v1437 = vpop.f32.mrb[0].mxu0
      %v1438 = vadd.f32 %v1383, %v1437
      %v1439 = vpop.f32.mrb[0].mxu0
      %v1440 = vadd.f32 %v1383, %v1439
      %1441 = vdwg.mxu0
      %v1442 = vmax.f32 %v1434, 0.0
      %v1443 = vmax.f32 %v1436, 0.0
      %v1444 = vmax.f32 %v1438, 0.0
      %v1445 = vmax.f32 %v1440, 0.0
      %v1446 = vld [vmem:[%s21] sm:$0xf]
      %v1447 = vld [vmem:[%s21 + $0x4] sm:$0xf]
      %v1448 = vld [vmem:[%s1195] sm:$0xf]
      %v1449 = vld [vmem:[%s23] sm:$0xff]
      %v1450 = vld [vmem:[%s23 + $0x8] sm:$0xff]
      %1452 = vset.pattern.permute.xlu0 0
      %1453 = vperm.xlu0 %1452, %v1449
      %v1454 = vpop.permute.xlu0 %1453
      %1457 = vset.pattern.permute.xlu0 0
      %1458 = vperm.xlu0 %1457, %v1450
      %v1459 = vpop.permute.xlu0 %1458
      %v1463 = vunpack.c.l.b16 %v1446
      %v1464 = vunpack.c.l.b16 %v1447
      %v1465 = vpack.c.b16 %v1464, %v1463
      %v1468 = vunpack.c.l.s4 1983009808
      %v1469 = vunpack.c.0.s8 %v1468
      %v1470 = vlaneseq
      %v1471 = vshrl.u32 %v1470, 7
      %v1472 = vsub.s32 %v1469, %v1471
      %v1473 = vrot.slane %v1448, %v1472
      %v1474 = vcombine.high %v1473, %v1473
      %v1476 = vsel %vm1249, %v1465, 0
      %v1479 = vand.u32 %v1473, %v1256
      %v1482 = vand.u32 %v1474, %v1256
      %1484 = vmatprep.subr.bf16.mxu0 %v1482
      %1485 = vmatpush1.bf16.msra.mxu0 %v1479
      %1486 = vmatprep.subr.bf16.mxu0 0
      %1487 = vmatpush1.bf16.msra.mxu0 0
      %1488 = vmatprep.subr.bf16.mxu0 0
      %1489 = vmatpush1.bf16.msra.mxu0 0
      %1490 = vmatprep.subr.bf16.mxu0 0
      %1491 = vmatpush1.bf16.msra.mxu0 0
      %1492 = vmatprep.subr.bf16.mxu0 0
      %1493 = vmatpush1.bf16.msra.mxu0 0
      %1494 = vmatprep.subr.bf16.mxu0 0
      %1495 = vmatpush1.bf16.msra.mxu0 0
      %1496 = vmatprep.subr.bf16.mxu0 0
      %1497 = vmatpush1.bf16.msra.mxu0 0
      %1498 = vmatprep.subr.bf16.mxu0 0
      %1499 = vmatpush1.bf16.msra.mxu0 0
      %1500 = vmatprep.subr.bf16.mxu0 0
      %1501 = vmatpush1.bf16.msra.mxu0 0
      %1502 = vmatprep.subr.bf16.mxu0 0
      %1503 = vmatpush1.bf16.msra.mxu0 0
      %1504 = vmatprep.subr.bf16.mxu0 0
      %1505 = vmatpush1.bf16.msra.mxu0 0
      %1506 = vmatprep.subr.bf16.mxu0 0
      %1507 = vmatpush1.bf16.msra.mxu0 0
      %1508 = vmatprep.subr.bf16.mxu0 0
      %1509 = vmatpush1.bf16.msra.mxu0 0
      %1510 = vmatprep.subr.bf16.mxu0 0
      %1511 = vmatpush1.bf16.msra.mxu0 0
      %1512 = vmatprep.subr.bf16.mxu0 0
      %1513 = vmatpush1.bf16.msra.mxu0 0
      %1514 = vmatprep.subr.bf16.mxu0 0
      %1515 = vmatpush1.bf16.msra.mxu0 0
      %1516 = vmatprep.mubr.bf16.mxu0 0
      %1517 = vmatmul.mubr.bf16.gmra.mrb[0].mxu0 %v1476
      %v1518 = vpop.f32.mrb[0].mxu0
      %v1519 = vadd.f32 %v1454, %v1518
      %v1520 = vpop.f32.mrb[0].mxu0
      %v1521 = vadd.f32 %v1454, %v1520
      %v1522 = vpop.f32.mrb[0].mxu0
      %v1523 = vadd.f32 %v1459, %v1522
      %v1524 = vpop.f32.mrb[0].mxu0
      %v1525 = vadd.f32 %v1459, %v1524
      %1526 = vdwg.mxu0
      %v1527 = vmax.f32 %v1519, 0.0
      %v1528 = vmax.f32 %v1521, 0.0
      %v1529 = vmax.f32 %v1523, 0.0
      %v1530 = vmax.f32 %v1525, 0.0
      %v1531 = vld [vmem:[%s25] sm:$0xf]
      %v1532 = vpack.c.bf16 %v1529, %v1527
      %v1533 = vpack.c.bf16 %v1530, %v1528
      %v1534 = vld [vmem:[%s27] sm:$0xff]
      %1536 = vset.pattern.permute.xlu0 0
      %1537 = vperm.xlu0 %1536, %v1534
      %v1538 = vpop.permute.xlu0 %1537
      %vm1540 = vcmask 130048
      %v1542 = vsel %vm1540, %v1531, 0
      %1544 = vmatprep.subr.bf16.mxu0 %v1533
      %1545 = vmatpush1.bf16.msra.mxu0 %v1532
      %1546 = vmatprep.subr.bf16.mxu0 0
      %1547 = vmatpush1.bf16.msra.mxu0 0
      %1548 = vmatprep.subr.bf16.mxu0 0
      %1549 = vmatpush1.bf16.msra.mxu0 0
      %1550 = vmatprep.subr.bf16.mxu0 0
      %1551 = vmatpush1.bf16.msra.mxu0 0
      %1552 = vmatprep.subr.bf16.mxu0 0
      %1553 = vmatpush1.bf16.msra.mxu0 0
      %1554 = vmatprep.subr.bf16.mxu0 0
      %1555 = vmatpush1.bf16.msra.mxu0 0
      %1556 = vmatprep.subr.bf16.mxu0 0
      %1557 = vmatpush1.bf16.msra.mxu0 0
      %1558 = vmatprep.subr.bf16.mxu0 0
      %1559 = vmatpush1.bf16.msra.mxu0 0
      %1560 = vmatprep.subr.bf16.mxu0 0
      %1561 = vmatpush1.bf16.msra.mxu0 0
      %1562 = vmatprep.subr.bf16.mxu0 0
      %1563 = vmatpush1.bf16.msra.mxu0 0
      %1564 = vmatprep.subr.bf16.mxu0 0
      %1565 = vmatpush1.bf16.msra.mxu0 0
      %1566 = vmatprep.subr.bf16.mxu0 0
      %1567 = vmatpush1.bf16.msra.mxu0 0
      %1568 = vmatprep.subr.bf16.mxu0 0
      %1569 = vmatpush1.bf16.msra.mxu0 0
      %1570 = vmatprep.subr.bf16.mxu0 0
      %1571 = vmatpush1.bf16.msra.mxu0 0
      %1572 = vmatprep.subr.bf16.mxu0 0
      %1573 = vmatpush1.bf16.msra.mxu0 0
      %1574 = vmatprep.subr.bf16.mxu0 0
      %1575 = vmatpush1.bf16.msra.mxu0 0
      %1576 = vmatprep.mubr.bf16.mxu0 0
      %1577 = vmatmul.mubr.bf16.gmra.mrb[0].mxu0 %v1542
      %v1578 = vpop.f32.mrb[0].mxu0
      %v1579 = vadd.f32 %v1538, %v1578
      %v1580 = vpop.f32.mrb[0].mxu0
      %v1581 = vadd.f32 %v1538, %v1580
      %v1582 = vpop.f32.mrb[0].mxu0
      %v1583 = vpop.f32.mrb[0].mxu0
      %1584 = vdwg.mxu0
      %v1585 = vmax.f32 %v1579, 0.0
      %v1586 = vmax.f32 %v1581, 0.0
      %v1587 = vld [vmem:[%s29] sm:$0xf]
      %v1588 = vld [vmem:[%s29 + $0x4] sm:$0xf]
      %v1589 = vpack.c.bf16 %v1585, %v1585
      %v1590 = vpack.c.bf16 %v1586, %v1586
      %v1591 = vld [vmem:[%s31] sm:$0xff]
      %v1592 = vld [vmem:[%s31 + $0x8] sm:$0xff]
      %1594 = vset.pattern.permute.xlu0 0
      %1595 = vperm.xlu0 %1594, %v1591
      %v1596 = vpop.permute.xlu0 %1595
      %1599 = vset.pattern.permute.xlu0 0
      %1600 = vperm.xlu0 %1599, %v1592
      %v1601 = vpop.permute.xlu0 %1600
      %v1605 = vunpack.c.l.b16 %v1587
      %v1606 = vunpack.c.l.b16 %v1588
      %v1607 = vpack.c.b16 %v1606, %v1605
      %v1609 = vsel %vm1315, %v1607, 0
      %v1612 = vsel %vm1319, %v1589, 0
      %v1615 = vsel %vm1319, %v1590, 0
      %1617 = vmatprep.subr.bf16.mxu0 %v1615
      %1618 = vmatpush1.bf16.msra.mxu0 %v1612
      %1619 = vmatprep.subr.bf16.mxu0 0
      %1620 = vmatpush1.bf16.msra.mxu0 0
      %1621 = vmatprep.subr.bf16.mxu0 0
      %1622 = vmatpush1.bf16.msra.mxu0 0
      %1623 = vmatprep.subr.bf16.mxu0 0
      %1624 = vmatpush1.bf16.msra.mxu0 0
      %1625 = vmatprep.subr.bf16.mxu0 0
      %1626 = vmatpush1.bf16.msra.mxu0 0
      %1627 = vmatprep.subr.bf16.mxu0 0
      %1628 = vmatpush1.bf16.msra.mxu0 0
      %1629 = vmatprep.subr.bf16.mxu0 0
      %1630 = vmatpush1.bf16.msra.mxu0 0
      %1631 = vmatprep.subr.bf16.mxu0 0
      %1632 = vmatpush1.bf16.msra.mxu0 0
      %1633 = vmatprep.subr.bf16.mxu0 0
      %1634 = vmatpush1.bf16.msra.mxu0 0
      %1635 = vmatprep.subr.bf16.mxu0 0
      %1636 = vmatpush1.bf16.msra.mxu0 0
      %1637 = vmatprep.subr.bf16.mxu0 0
      %1638 = vmatpush1.bf16.msra.mxu0 0
      %1639 = vmatprep.subr.bf16.mxu0 0
      %1640 = vmatpush1.bf16.msra.mxu0 0
      %1641 = vmatprep.subr.bf16.mxu0 0
      %1642 = vmatpush1.bf16.msra.mxu0 0
      %1643 = vmatprep.subr.bf16.mxu0 0
      %1644 = vmatpush1.bf16.msra.mxu0 0
      %1645 = vmatprep.subr.bf16.mxu0 0
      %1646 = vmatpush1.bf16.msra.mxu0 0
      %1647 = vmatprep.subr.bf16.mxu0 0
      %1648 = vmatpush1.bf16.msra.mxu0 0
      %1649 = vmatprep.mubr.bf16.mxu0 0
      %1650 = vmatmul.mubr.bf16.gmra.mrb[0].mxu0 %v1609
      %v1651 = vpop.f32.mrb[0].mxu0
      %v1652 = vadd.f32 %v1596, %v1651
      %v1653 = vpop.f32.mrb[0].mxu0
      %v1654 = vadd.f32 %v1596, %v1653
      %v1655 = vpop.f32.mrb[0].mxu0
      %v1656 = vadd.f32 %v1601, %v1655
      %v1657 = vpop.f32.mrb[0].mxu0
      %v1658 = vadd.f32 %v1601, %v1657
      %1659 = vdwg.mxu0
      %v1660 = vmax.f32 %v1652, 0.0
      %v1661 = vmax.f32 %v1654, 0.0
      %v1662 = vmax.f32 %v1656, 0.0
      %v1663 = vmax.f32 %v1658, 0.0
      %v1664 = vadd.f32 %v1442, %v1660
      %v1665 = vadd.f32 %v1443, %v1661
      %v1666 = vadd.f32 %v1444, %v1662
      %v1667 = vadd.f32 %v1445, %v1663
      %v1668 = vld [vmem:[%s33] sm:$0xf]
      %v1669 = vld [vmem:[%s33 + $0x4] sm:$0xf]
      %v1670 = vld [vmem:[%s33 + $0x8] sm:$0xf]
      %v1671 = vld [vmem:[%s33 + $0xc] sm:$0xf]
      %v1672 = vld [vmem:[%s1205] sm:$0xf]
      %v1673 = vld [vmem:[%s35] sm:$0xff]
      %v1674 = vld [vmem:[%s35 + $0x8] sm:$0xff]
      %v1675 = vld [vmem:[%s35 + $0x10] sm:$0xff]
      %v1676 = vld [vmem:[%s35 + $0x18] sm:$0xff]
      %1678 = vset.pattern.permute.xlu0 0
      %1679 = vperm.xlu0 %1678, %v1673
      %v1680 = vpop.permute.xlu0 %1679
      %1683 = vset.pattern.permute.xlu0 0
      %1684 = vperm.xlu0 %1683, %v1674
      %v1685 = vpop.permute.xlu0 %1684
      %1688 = vset.pattern.permute.xlu0 0
      %1689 = vperm.xlu0 %1688, %v1675
      %v1690 = vpop.permute.xlu0 %1689
      %1693 = vset.pattern.permute.xlu0 0
      %1694 = vperm.xlu0 %1693, %v1676
      %v1695 = vpop.permute.xlu0 %1694
      %v1701 = vunpack.c.l.b16 %v1668
      %v1702 = vunpack.c.l.b16 %v1669
      %v1703 = vunpack.c.l.b16 %v1670
      %v1704 = vunpack.c.l.b16 %v1671
      %v1705 = vpack.c.b16 %v1702, %v1701
      %v1706 = vpack.c.b16 %v1704, %v1703
      %v1709 = vunpack.c.l.s4 1983009808
      %v1710 = vunpack.c.0.s8 %v1709
      %v1711 = vlaneseq
      %v1712 = vshrl.u32 %v1711, 7
      %v1713 = vsub.s32 %v1710, %v1712
      %v1714 = vrot.slane %v1672, %v1713
      %v1715 = vcombine.high %v1714, %v1714
      %v1717 = vsel %vm1249, %v1705, 0
      %v1720 = vsel %vm1249, %v1706, 0
      %v1723 = vand.u32 %v1714, %v1256
      %v1726 = vand.u32 %v1715, %v1256
      %1728 = vmatprep.subr.bf16.mxu0 %v1726
      %1729 = vmatpush1.bf16.msra.mxu0 %v1723
      %1730 = vmatprep.subr.bf16.mxu0 0
      %1731 = vmatpush1.bf16.msra.mxu0 0
      %1732 = vmatprep.subr.bf16.mxu0 0
      %1733 = vmatpush1.bf16.msra.mxu0 0
      %1734 = vmatprep.subr.bf16.mxu0 0
      %1735 = vmatpush1.bf16.msra.mxu0 0
      %1736 = vmatprep.subr.bf16.mxu0 0
      %1737 = vmatpush1.bf16.msra.mxu0 0
      %1738 = vmatprep.subr.bf16.mxu0 0
      %1739 = vmatpush1.bf16.msra.mxu0 0
      %1740 = vmatprep.subr.bf16.mxu0 0
      %1741 = vmatpush1.bf16.msra.mxu0 0
      %1742 = vmatprep.subr.bf16.mxu0 0
      %1743 = vmatpush1.bf16.msra.mxu0 0
      %1744 = vmatprep.subr.bf16.mxu0 0
      %1745 = vmatpush1.bf16.msra.mxu0 0
      %1746 = vmatprep.subr.bf16.mxu0 0
      %1747 = vmatpush1.bf16.msra.mxu0 0
      %1748 = vmatprep.subr.bf16.mxu0 0
      %1749 = vmatpush1.bf16.msra.mxu0 0
      %1750 = vmatprep.subr.bf16.mxu0 0
      %1751 = vmatpush1.bf16.msra.mxu0 0
      %1752 = vmatprep.subr.bf16.mxu0 0
      %1753 = vmatpush1.bf16.msra.mxu0 0
      %1754 = vmatprep.subr.bf16.mxu0 0
      %1755 = vmatpush1.bf16.msra.mxu0 0
      %1756 = vmatprep.subr.bf16.mxu0 0
      %1757 = vmatpush1.bf16.msra.mxu0 0
      %1758 = vmatprep.subr.bf16.mxu0 0
      %1759 = vmatpush1.bf16.msra.mxu0 0
      %1760 = vmatprep.mubr.bf16.mxu0 0
      %1761 = vmatmul.mubr.bf16.gmra.mrb[0].mxu0 %v1717
      %v1762 = vpop.f32.mrb[0].mxu0
      %v1763 = vadd.f32 %v1680, %v1762
      %v1764 = vpop.f32.mrb[0].mxu0
      %v1765 = vadd.f32 %v1680, %v1764
      %v1766 = vpop.f32.mrb[0].mxu0
      %v1767 = vadd.f32 %v1685, %v1766
      %v1768 = vpop.f32.mrb[0].mxu0
      %v1769 = vadd.f32 %v1685, %v1768
      %1770 = vmatprep.mubr.bf16.mxu0 0
      %1771 = vmatmul.mubr.bf16.gmra.mrb[0].mxu0 %v1720
      %v1772 = vpop.f32.mrb[0].mxu0
      %v1773 = vadd.f32 %v1690, %v1772
      %v1774 = vpop.f32.mrb[0].mxu0
      %v1775 = vadd.f32 %v1690, %v1774
      %v1776 = vpop.f32.mrb[0].mxu0
      %v1777 = vadd.f32 %v1695, %v1776
      %v1778 = vpop.f32.mrb[0].mxu0
      %v1779 = vadd.f32 %v1695, %v1778
      %1780 = vdwg.mxu0
      %v1781 = vmax.f32 %v1763, 0.0
      %v1782 = vmax.f32 %v1765, 0.0
      %v1783 = vmax.f32 %v1767, 0.0
      %v1784 = vmax.f32 %v1769, 0.0
      %v1785 = vmax.f32 %v1773, 0.0
      %v1786 = vmax.f32 %v1775, 0.0
      %v1787 = vmax.f32 %v1777, 0.0
      %v1788 = vmax.f32 %v1779, 0.0
      %v1789 = vld [vmem:[%s37] sm:$0xf]
      %v1790 = vld [vmem:[%s37 + $0x4] sm:$0xf]
      %v1791 = vpack.c.bf16 %v1783, %v1781
      %v1792 = vpack.c.bf16 %v1784, %v1782
      %v1793 = vpack.c.bf16 %v1787, %v1785
      %v1794 = vpack.c.bf16 %v1788, %v1786
      %v1795 = vld [vmem:[%s39] sm:$0xff]
      %v1796 = vld [vmem:[%s39 + $0x8] sm:$0xff]
      %1798 = vset.pattern.permute.xlu0 0
      %1799 = vperm.xlu0 %1798, %v1795
      %v1800 = vpop.permute.xlu0 %1799
      %1803 = vset.pattern.permute.xlu0 0
      %1804 = vperm.xlu0 %1803, %v1796
      %v1805 = vpop.permute.xlu0 %1804
      %v1809 = vunpack.c.l.b16 %v1789
      %v1810 = vunpack.c.l.b16 %v1790
      %v1811 = vpack.c.b16 %v1810, %v1809
      %vm1812 = vcmask 261120
      %v1814 = vsel %vm1812, %v1811, 0
      %1816 = vmatprep.subr.bf16.mxu0 %v1792
      %1817 = vmatpush1.bf16.msra.mxu0 %v1791
      %1818 = vmatprep.subr.bf16.mxu0 %v1794
      %1819 = vmatpush1.bf16.msra.mxu0 %v1793
      %1820 = vmatprep.subr.bf16.mxu0 0
      %1821 = vmatpush1.bf16.msra.mxu0 0
      %1822 = vmatprep.subr.bf16.mxu0 0
      %1823 = vmatpush1.bf16.msra.mxu0 0
      %1824 = vmatprep.subr.bf16.mxu0 0
      %1825 = vmatpush1.bf16.msra.mxu0 0
      %1826 = vmatprep.subr.bf16.mxu0 0
      %1827 = vmatpush1.bf16.msra.mxu0 0
      %1828 = vmatprep.subr.bf16.mxu0 0
      %1829 = vmatpush1.bf16.msra.mxu0 0
      %1830 = vmatprep.subr.bf16.mxu0 0
      %1831 = vmatpush1.bf16.msra.mxu0 0
      %1832 = vmatprep.subr.bf16.mxu0 0
      %1833 = vmatpush1.bf16.msra.mxu0 0
      %1834 = vmatprep.subr.bf16.mxu0 0
      %1835 = vmatpush1.bf16.msra.mxu0 0
      %1836 = vmatprep.subr.bf16.mxu0 0
      %1837 = vmatpush1.bf16.msra.mxu0 0
      %1838 = vmatprep.subr.bf16.mxu0 0
      %1839 = vmatpush1.bf16.msra.mxu0 0
      %1840 = vmatprep.subr.bf16.mxu0 0
      %1841 = vmatpush1.bf16.msra.mxu0 0
      %1842 = vmatprep.subr.bf16.mxu0 0
      %1843 = vmatpush1.bf16.msra.mxu0 0
      %1844 = vmatprep.subr.bf16.mxu0 0
      %1845 = vmatpush1.bf16.msra.mxu0 0
      %1846 = vmatprep.subr.bf16.mxu0 0
      %1847 = vmatpush1.bf16.msra.mxu0 0
      %1848 = vmatprep.mubr.bf16.mxu0 0
      %1849 = vmatmul.mubr.bf16.gmra.mrb[0].mxu0 %v1814
      %v1850 = vpop.f32.mrb[0].mxu0
      %v1851 = vadd.f32 %v1800, %v1850
      %v1852 = vpop.f32.mrb[0].mxu0
      %v1853 = vadd.f32 %v1800, %v1852
      %v1854 = vpop.f32.mrb[0].mxu0
      %v1855 = vadd.f32 %v1805, %v1854
      %v1856 = vpop.f32.mrb[0].mxu0
      %v1857 = vadd.f32 %v1805, %v1856
      %1858 = vdwg.mxu0
      %v1859 = vmax.f32 %v1851, 0.0
      %v1860 = vmax.f32 %v1853, 0.0
      %v1861 = vmax.f32 %v1855, 0.0
      %v1862 = vmax.f32 %v1857, 0.0
      %v1863 = vld [vmem:[%s41] sm:$0xf]
      %v1864 = vld [vmem:[%s41 + $0x4] sm:$0xf]
      %v1865 = vpack.c.bf16 %v1861, %v1859
      %v1866 = vpack.c.bf16 %v1862, %v1860
      %v1867 = vld [vmem:[%s43] sm:$0xff]
      %v1868 = vld [vmem:[%s43 + $0x8] sm:$0xff]
      %1870 = vset.pattern.permute.xlu0 0
      %1871 = vperm.xlu0 %1870, %v1867
      %v1872 = vpop.permute.xlu0 %1871
      %1875 = vset.pattern.permute.xlu0 0
      %1876 = vperm.xlu0 %1875, %v1868
      %v1877 = vpop.permute.xlu0 %1876
      %v1881 = vunpack.c.l.b16 %v1863
      %v1882 = vunpack.c.l.b16 %v1864
      %v1883 = vpack.c.b16 %v1882, %v1881
      %v1885 = vsel %vm1540, %v1883, 0
      %1887 = vmatprep.subr.bf16.mxu0 %v1866
      %1888 = vmatpush1.bf16.msra.mxu0 %v1865
      %1889 = vmatprep.subr.bf16.mxu0 0
      %1890 = vmatpush1.bf16.msra.mxu0 0
      %1891 = vmatprep.subr.bf16.mxu0 0
      %1892 = vmatpush1.bf16.msra.mxu0 0
      %1893 = vmatprep.subr.bf16.mxu0 0
      %1894 = vmatpush1.bf16.msra.mxu0 0
      %1895 = vmatprep.subr.bf16.mxu0 0
      %1896 = vmatpush1.bf16.msra.mxu0 0
      %1897 = vmatprep.subr.bf16.mxu0 0
      %1898 = vmatpush1.bf16.msra.mxu0 0
      %1899 = vmatprep.subr.bf16.mxu0 0
      %1900 = vmatpush1.bf16.msra.mxu0 0
      %1901 = vmatprep.subr.bf16.mxu0 0
      %1902 = vmatpush1.bf16.msra.mxu0 0
      %1903 = vmatprep.subr.bf16.mxu0 0
      %1904 = vmatpush1.bf16.msra.mxu0 0
      %1905 = vmatprep.subr.bf16.mxu0 0
      %1906 = vmatpush1.bf16.msra.mxu0 0
      %1907 = vmatprep.subr.bf16.mxu0 0
      %1908 = vmatpush1.bf16.msra.mxu0 0
      %1909 = vmatprep.subr.bf16.mxu0 0
      %1910 = vmatpush1.bf16.msra.mxu0 0
      %1911 = vmatprep.subr.bf16.mxu0 0
      %1912 = vmatpush1.bf16.msra.mxu0 0
      %1913 = vmatprep.subr.bf16.mxu0 0
      %1914 = vmatpush1.bf16.msra.mxu0 0
      %1915 = vmatprep.subr.bf16.mxu0 0
      %1916 = vmatpush1.bf16.msra.mxu0 0
      %1917 = vmatprep.subr.bf16.mxu0 0
      %1918 = vmatpush1.bf16.msra.mxu0 0
      %1919 = vmatprep.mubr.bf16.mxu0 0
      %1920 = vmatmul.mubr.bf16.gmra.mrb[0].mxu0 %v1885
      %v1921 = vpop.f32.mrb[0].mxu0
      %v1922 = vadd.f32 %v1872, %v1921
      %v1923 = vpop.f32.mrb[0].mxu0
      %v1924 = vadd.f32 %v1872, %v1923
      %v1925 = vpop.f32.mrb[0].mxu0
      %v1926 = vadd.f32 %v1877, %v1925
      %v1927 = vpop.f32.mrb[0].mxu0
      %v1928 = vadd.f32 %v1877, %v1927
      %1929 = vdwg.mxu0
      %v1930 = vmax.f32 %v1922, 0.0
      %v1931 = vmax.f32 %v1924, 0.0
      %v1932 = vmax.f32 %v1926, 0.0
      %v1933 = vmax.f32 %v1928, 0.0
      %v1934 = vadd.f32 %v1664, %v1930
      %v1935 = vadd.f32 %v1665, %v1931
      %v1936 = vadd.f32 %v1666, %v1932
      %v1937 = vadd.f32 %v1667, %v1933
      %v1938 = vld [vmem:[%s45] sm:$0xf]
      %v1939 = vld [vmem:[%s45 + $0x4] sm:$0xf]
      %v1940 = vld [vmem:[%s45 + $0x8] sm:$0xf]
      %v1941 = vld [vmem:[%s45 + $0xc] sm:$0xf]
      %v1942 = vld [vmem:[%s45 + $0x10] sm:$0xf]
      %v1943 = vld [vmem:[%s45 + $0x14] sm:$0xf]
      %v1944 = vld [vmem:[%s45 + $0x18] sm:$0xf]
      %v1945 = vld [vmem:[%s45 + $0x1c] sm:$0xf]
      %v1946 = vld [vmem:[%s1215] sm:$0xf]
      %v1947 = vld [vmem:[%s47] sm:$0xff]
      %v1948 = vld [vmem:[%s47 + $0x8] sm:$0xff]
      %v1949 = vld [vmem:[%s47 + $0x10] sm:$0xff]
      %v1950 = vld [vmem:[%s47 + $0x18] sm:$0xff]
      %v1951 = vld [vmem:[%s47 + $0x20] sm:$0xff]
      %v1952 = vld [vmem:[%s47 + $0x28] sm:$0xff]
      %v1953 = vld [vmem:[%s47 + $0x30] sm:$0xff]
      %v1954 = vld [vmem:[%s47 + $0x38] sm:$0xff]
      %1956 = vset.pattern.permute.xlu0 0
      %1957 = vperm.xlu0 %1956, %v1947
      %v1958 = vpop.permute.xlu0 %1957
      %1961 = vset.pattern.permute.xlu0 0
      %1962 = vperm.xlu0 %1961, %v1948
      %v1963 = vpop.permute.xlu0 %1962
      %1966 = vset.pattern.permute.xlu0 0
      %1967 = vperm.xlu0 %1966, %v1949
      %v1968 = vpop.permute.xlu0 %1967
      %1971 = vset.pattern.permute.xlu0 0
      %1972 = vperm.xlu0 %1971, %v1950
      %v1973 = vpop.permute.xlu0 %1972
      %1976 = vset.pattern.permute.xlu0 0
      %1977 = vperm.xlu0 %1976, %v1951
      %v1978 = vpop.permute.xlu0 %1977
      %1981 = vset.pattern.permute.xlu0 0
      %1982 = vperm.xlu0 %1981, %v1952
      %v1983 = vpop.permute.xlu0 %1982
      %1986 = vset.pattern.permute.xlu0 0
      %1987 = vperm.xlu0 %1986, %v1953
      %v1988 = vpop.permute.xlu0 %1987
      %1991 = vset.pattern.permute.xlu0 0
      %1992 = vperm.xlu0 %1991, %v1954
      %v1993 = vpop.permute.xlu0 %1992
      %v2003 = vunpack.c.l.b16 %v1938
      %v2004 = vunpack.c.l.b16 %v1939
      %v2005 = vunpack.c.l.b16 %v1940
      %v2006 = vunpack.c.l.b16 %v1941
      %v2007 = vunpack.c.l.b16 %v1942
      %v2008 = vunpack.c.l.b16 %v1943
      %v2009 = vunpack.c.l.b16 %v1944
      %v2010 = vunpack.c.l.b16 %v1945
      %v2011 = vpack.c.b16 %v2004, %v2003
      %v2012 = vpack.c.b16 %v2006, %v2005
      %v2013 = vpack.c.b16 %v2008, %v2007
      %v2014 = vpack.c.b16 %v2010, %v2009
      %v2017 = vunpack.c.l.s4 1983009808
      %v2018 = vunpack.c.0.s8 %v2017
      %v2019 = vlaneseq
      %v2020 = vshrl.u32 %v2019, 7
      %v2021 = vsub.s32 %v2018, %v2020
      %v2022 = vrot.slane %v1946, %v2021
      %v2023 = vcombine.high %v2022, %v2022
      %v2025 = vsel %vm1249, %v2011, 0
      %v2028 = vsel %vm1249, %v2012, 0
      %v2031 = vsel %vm1249, %v2013, 0
      %v2034 = vsel %vm1249, %v2014, 0
      %v2037 = vand.u32 %v2022, %v1256
      %v2040 = vand.u32 %v2023, %v1256
      %2042 = vmatprep.subr.bf16.mxu0 %v2040
      %2043 = vmatpush1.bf16.msra.mxu0 %v2037
      %2044 = vmatprep.subr.bf16.mxu0 0
      %2045 = vmatpush1.bf16.msra.mxu0 0
      %2046 = vmatprep.subr.bf16.mxu0 0
      %2047 = vmatpush1.bf16.msra.mxu0 0
      %2048 = vmatprep.subr.bf16.mxu0 0
      %2049 = vmatpush1.bf16.msra.mxu0 0
      %2050 = vmatprep.subr.bf16.mxu0 0
      %2051 = vmatpush1.bf16.msra.mxu0 0
      %2052 = vmatprep.subr.bf16.mxu0 0
      %2053 = vmatpush1.bf16.msra.mxu0 0
      %2054 = vmatprep.subr.bf16.mxu0 0
      %2055 = vmatpush1.bf16.msra.mxu0 0
      %2056 = vmatprep.subr.bf16.mxu0 0
      %2057 = vmatpush1.bf16.msra.mxu0 0
      %2058 = vmatprep.subr.bf16.mxu0 0
      %2059 = vmatpush1.bf16.msra.mxu0 0
      %2060 = vmatprep.subr.bf16.mxu0 0
      %2061 = vmatpush1.bf16.msra.mxu0 0
      %2062 = vmatprep.subr.bf16.mxu0 0
      %2063 = vmatpush1.bf16.msra.mxu0 0
      %2064 = vmatprep.subr.bf16.mxu0 0
      %2065 = vmatpush1.bf16.msra.mxu0 0
      %2066 = vmatprep.subr.bf16.mxu0 0
      %2067 = vmatpush1.bf16.msra.mxu0 0
      %2068 = vmatprep.subr.bf16.mxu0 0
      %2069 = vmatpush1.bf16.msra.mxu0 0
      %2070 = vmatprep.subr.bf16.mxu0 0
      %2071 = vmatpush1.bf16.msra.mxu0 0
      %2072 = vmatprep.subr.bf16.mxu0 0
      %2073 = vmatpush1.bf16.msra.mxu0 0
      %2074 = vmatprep.mubr.bf16.mxu0 0
      %2075 = vmatmul.mubr.bf16.gmra.mrb[0].mxu0 %v2025
      %v2076 = vpop.f32.mrb[0].mxu0
      %v2077 = vadd.f32 %v1958, %v2076
      %v2078 = vpop.f32.mrb[0].mxu0
      %v2079 = vadd.f32 %v1958, %v2078
      %v2080 = vpop.f32.mrb[0].mxu0
      %v2081 = vadd.f32 %v1963, %v2080
      %v2082 = vpop.f32.mrb[0].mxu0
      %v2083 = vadd.f32 %v1963, %v2082
      %2084 = vmatprep.mubr.bf16.mxu0 0
      %2085 = vmatmul.mubr.bf16.gmra.mrb[0].mxu0 %v2028
      %v2086 = vpop.f32.mrb[0].mxu0
      %v2087 = vadd.f32 %v1968, %v2086
      %v2088 = vpop.f32.mrb[0].mxu0
      %v2089 = vadd.f32 %v1968, %v2088
      %v2090 = vpop.f32.mrb[0].mxu0
      %v2091 = vadd.f32 %v1973, %v2090
      %v2092 = vpop.f32.mrb[0].mxu0
      %v2093 = vadd.f32 %v1973, %v2092
      %2094 = vmatprep.mubr.bf16.mxu0 0
      %2095 = vmatmul.mubr.bf16.gmra.mrb[0].mxu0 %v2031
      %v2096 = vpop.f32.mrb[0].mxu0
      %v2097 = vadd.f32 %v1978, %v2096
      %v2098 = vpop.f32.mrb[0].mxu0
      %v2099 = vadd.f32 %v1978, %v2098
      %v2100 = vpop.f32.mrb[0].mxu0
      %v2101 = vadd.f32 %v1983, %v2100
      %v2102 = vpop.f32.mrb[0].mxu0
      %v2103 = vadd.f32 %v1983, %v2102
      %2104 = vmatprep.mubr.bf16.mxu0 0
      %2105 = vmatmul.mubr.bf16.gmra.mrb[0].mxu0 %v2034
      %v2106 = vpop.f32.mrb[0].mxu0
      %v2107 = vadd.f32 %v1988, %v2106
      %v2108 = vpop.f32.mrb[0].mxu0
      %v2109 = vadd.f32 %v1988, %v2108
      %v2110 = vpop.f32.mrb[0].mxu0
      %v2111 = vadd.f32 %v1993, %v2110
      %v2112 = vpop.f32.mrb[0].mxu0
      %v2113 = vadd.f32 %v1993, %v2112
      %2114 = vdwg.mxu0
      %v2115 = vmax.f32 %v2077, 0.0
      %v2116 = vmax.f32 %v2079, 0.0
      %v2117 = vmax.f32 %v2081, 0.0
      %v2118 = vmax.f32 %v2083, 0.0
      %v2119 = vmax.f32 %v2087, 0.0
      %v2120 = vmax.f32 %v2089, 0.0
      %v2121 = vmax.f32 %v2091, 0.0
      %v2122 = vmax.f32 %v2093, 0.0
      %v2123 = vmax.f32 %v2097, 0.0
      %v2124 = vmax.f32 %v2099, 0.0
      %v2125 = vmax.f32 %v2101, 0.0
      %v2126 = vmax.f32 %v2103, 0.0
      %v2127 = vmax.f32 %v2107, 0.0
      %v2128 = vmax.f32 %v2109, 0.0
      %v2129 = vmax.f32 %v2111, 0.0
      %v2130 = vmax.f32 %v2113, 0.0
      %v2131 = vld [vmem:[%s49] sm:$0xf]
      %v2132 = vld [vmem:[%s49 + $0x4] sm:$0xf]
      %v2133 = vpack.c.bf16 %v2117, %v2115
      %v2134 = vpack.c.bf16 %v2118, %v2116
      %v2135 = vpack.c.bf16 %v2121, %v2119
      %v2136 = vpack.c.bf16 %v2122, %v2120
      %v2137 = vpack.c.bf16 %v2125, %v2123
      %v2138 = vpack.c.bf16 %v2126, %v2124
      %v2139 = vpack.c.bf16 %v2129, %v2127
      %v2140 = vpack.c.bf16 %v2130, %v2128
      %v2141 = vld [vmem:[%s51] sm:$0xff]
      %v2142 = vld [vmem:[%s51 + $0x8] sm:$0xff]
      %2144 = vset.pattern.permute.xlu0 0
      %2145 = vperm.xlu0 %2144, %v2141
      %v2146 = vpop.permute.xlu0 %2145
      %2149 = vset.pattern.permute.xlu0 0
      %2150 = vperm.xlu0 %2149, %v2142
      %v2151 = vpop.permute.xlu0 %2150
      %v2155 = vunpack.c.l.b16 %v2131
      %v2156 = vunpack.c.l.b16 %v2132
      %v2157 = vpack.c.b16 %v2156, %v2155
      %vm2158 = vcmask 523264
      %v2160 = vsel %vm2158, %v2157, 0
      %2162 = vmatprep.subr.bf16.mxu0 %v2134
      %2163 = vmatpush1.bf16.msra.mxu0 %v2133
      %2164 = vmatprep.subr.bf16.mxu0 %v2136
      %2165 = vmatpush1.bf16.msra.mxu0 %v2135
      %2166 = vmatprep.subr.bf16.mxu0 %v2138
      %2167 = vmatpush1.bf16.msra.mxu0 %v2137
      %2168 = vmatprep.subr.bf16.mxu0 %v2140
      %2169 = vmatpush1.bf16.msra.mxu0 %v2139
      %2170 = vmatprep.subr.bf16.mxu0 0
      %2171 = vmatpush1.bf16.msra.mxu0 0
      %2172 = vmatprep.subr.bf16.mxu0 0
      %2173 = vmatpush1.bf16.msra.mxu0 0
      %2174 = vmatprep.subr.bf16.mxu0 0
      %2175 = vmatpush1.bf16.msra.mxu0 0
      %2176 = vmatprep.subr.bf16.mxu0 0
      %2177 = vmatpush1.bf16.msra.mxu0 0
      %2178 = vmatprep.subr.bf16.mxu0 0
      %2179 = vmatpush1.bf16.msra.mxu0 0
      %2180 = vmatprep.subr.bf16.mxu0 0
      %2181 = vmatpush1.bf16.msra.mxu0 0
      %2182 = vmatprep.subr.bf16.mxu0 0
      %2183 = vmatpush1.bf16.msra.mxu0 0
      %2184 = vmatprep.subr.bf16.mxu0 0
      %2185 = vmatpush1.bf16.msra.mxu0 0
      %2186 = vmatprep.subr.bf16.mxu0 0
      %2187 = vmatpush1.bf16.msra.mxu0 0
      %2188 = vmatprep.subr.bf16.mxu0 0
      %2189 = vmatpush1.bf16.msra.mxu0 0
      %2190 = vmatprep.subr.bf16.mxu0 0
      %2191 = vmatpush1.bf16.msra.mxu0 0
      %2192 = vmatprep.subr.bf16.mxu0 0
      %2193 = vmatpush1.bf16.msra.mxu0 0
      %2194 = vmatprep.mubr.bf16.mxu0 0
      %2195 = vmatmul.mubr.bf16.gmra.mrb[0].mxu0 %v2160
      %v2196 = vpop.f32.mrb[0].mxu0
      %v2197 = vadd.f32 %v2146, %v2196
      %v2198 = vpop.f32.mrb[0].mxu0
      %v2199 = vadd.f32 %v2146, %v2198
      %v2200 = vpop.f32.mrb[0].mxu0
      %v2201 = vadd.f32 %v2151, %v2200
      %v2202 = vpop.f32.mrb[0].mxu0
      %v2203 = vadd.f32 %v2151, %v2202
      %2204 = vdwg.mxu0
      %v2205 = vmax.f32 %v2197, 0.0
      %v2206 = vmax.f32 %v2199, 0.0
      %v2207 = vmax.f32 %v2201, 0.0
      %v2208 = vmax.f32 %v2203, 0.0
      %v2209 = vld [vmem:[%s53] sm:$0xf]
      %v2210 = vld [vmem:[%s53 + $0x4] sm:$0xf]
      %v2211 = vpack.c.bf16 %v2207, %v2205
      %v2212 = vpack.c.bf16 %v2208, %v2206
      %v2213 = vld [vmem:[%s55] sm:$0xff]
      %v2214 = vld [vmem:[%s55 + $0x8] sm:$0xff]
      %2216 = vset.pattern.permute.xlu0 0
      %2217 = vperm.xlu0 %2216, %v2213
      %v2218 = vpop.permute.xlu0 %2217
      %2221 = vset.pattern.permute.xlu0 0
      %2222 = vperm.xlu0 %2221, %v2214
      %v2223 = vpop.permute.xlu0 %2222
      %v2227 = vunpack.c.l.b16 %v2209
      %v2228 = vunpack.c.l.b16 %v2210
      %v2229 = vpack.c.b16 %v2228, %v2227
      %v2231 = vsel %vm1540, %v2229, 0
      %2233 = vmatprep.subr.bf16.mxu0 %v2212
      %2234 = vmatpush1.bf16.msra.mxu0 %v2211
      %2235 = vmatprep.subr.bf16.mxu0 0
      %2236 = vmatpush1.bf16.msra.mxu0 0
      %2237 = vmatprep.subr.bf16.mxu0 0
      %2238 = vmatpush1.bf16.msra.mxu0 0
      %2239 = vmatprep.subr.bf16.mxu0 0
      %2240 = vmatpush1.bf16.msra.mxu0 0
      %2241 = vmatprep.subr.bf16.mxu0 0
      %2242 = vmatpush1.bf16.msra.mxu0 0
      %2243 = vmatprep.subr.bf16.mxu0 0
      %2244 = vmatpush1.bf16.msra.mxu0 0
      %2245 = vmatprep.subr.bf16.mxu0 0
      %2246 = vmatpush1.bf16.msra.mxu0 0
      %2247 = vmatprep.subr.bf16.mxu0 0
      %2248 = vmatpush1.bf16.msra.mxu0 0
      %2249 = vmatprep.subr.bf16.mxu0 0
      %2250 = vmatpush1.bf16.msra.mxu0 0
      %2251 = vmatprep.subr.bf16.mxu0 0
      %2252 = vmatpush1.bf16.msra.mxu0 0
      %2253 = vmatprep.subr.bf16.mxu0 0
      %2254 = vmatpush1.bf16.msra.mxu0 0
      %2255 = vmatprep.subr.bf16.mxu0 0
      %2256 = vmatpush1.bf16.msra.mxu0 0
      %2257 = vmatprep.subr.bf16.mxu0 0
      %2258 = vmatpush1.bf16.msra.mxu0 0
      %2259 = vmatprep.subr.bf16.mxu0 0
      %2260 = vmatpush1.bf16.msra.mxu0 0
      %2261 = vmatprep.subr.bf16.mxu0 0
      %2262 = vmatpush1.bf16.msra.mxu0 0
      %2263 = vmatprep.subr.bf16.mxu0 0
      %2264 = vmatpush1.bf16.msra.mxu0 0
      %2265 = vmatprep.mubr.bf16.mxu0 0
      %2266 = vmatmul.mubr.bf16.gmra.mrb[0].mxu0 %v2231
      %v2267 = vpop.f32.mrb[0].mxu0
      %v2268 = vadd.f32 %v2218, %v2267
      %v2269 = vpop.f32.mrb[0].mxu0
      %v2270 = vadd.f32 %v2218, %v2269
      %v2271 = vpop.f32.mrb[0].mxu0
      %v2272 = vadd.f32 %v2223, %v2271
      %v2273 = vpop.f32.mrb[0].mxu0
      %v2274 = vadd.f32 %v2223, %v2273
      %2275 = vdwg.mxu0
      %v2276 = vmax.f32 %v2268, 0.0
      %v2277 = vmax.f32 %v2270, 0.0
      %v2278 = vmax.f32 %v2272, 0.0
      %v2279 = vmax.f32 %v2274, 0.0
      %v2280 = vadd.f32 %v1934, %v2276
      %v2281 = vadd.f32 %v1935, %v2277
      %v2282 = vadd.f32 %v1936, %v2278
      %v2283 = vadd.f32 %v1937, %v2279
      %v2284 = vpack.c.bf16 %v2282, %v2280
      %v2285 = vpack.c.bf16 %v2283, %v2281
      %v2286 = vld [vmem:[%s57] sm:$0x1]
      %v2287 = vld [vmem:[%s59] sm:$0x3]
      %2289 = vset.pattern.permute.xlu0 0
      %2290 = vperm.xlu0 %2289, %v2287
      %v2291 = vpop.permute.xlu0 %2290
      %v2294 = vsel %vm1540, %v2286, 0
      %2296 = vmatprep.subr.bf16.mxu0 %v2285
      %2297 = vmatpush1.bf16.msra.mxu0 %v2284
      %2298 = vmatprep.subr.bf16.mxu0 0
      %2299 = vmatpush1.bf16.msra.mxu0 0
      %2300 = vmatprep.subr.bf16.mxu0 0
      %2301 = vmatpush1.bf16.msra.mxu0 0
      %2302 = vmatprep.subr.bf16.mxu0 0
      %2303 = vmatpush1.bf16.msra.mxu0 0
      %2304 = vmatprep.subr.bf16.mxu0 0
      %2305 = vmatpush1.bf16.msra.mxu0 0
      %2306 = vmatprep.subr.bf16.mxu0 0
      %2307 = vmatpush1.bf16.msra.mxu0 0
      %2308 = vmatprep.subr.bf16.mxu0 0
      %2309 = vmatpush1.bf16.msra.mxu0 0
      %2310 = vmatprep.subr.bf16.mxu0 0
      %2311 = vmatpush1.bf16.msra.mxu0 0
      %2312 = vmatprep.subr.bf16.mxu0 0
      %2313 = vmatpush1.bf16.msra.mxu0 0
      %2314 = vmatprep.subr.bf16.mxu0 0
      %2315 = vmatpush1.bf16.msra.mxu0 0
      %2316 = vmatprep.subr.bf16.mxu0 0
      %2317 = vmatpush1.bf16.msra.mxu0 0
      %2318 = vmatprep.subr.bf16.mxu0 0
      %2319 = vmatpush1.bf16.msra.mxu0 0
      %2320 = vmatprep.subr.bf16.mxu0 0
      %2321 = vmatpush1.bf16.msra.mxu0 0
      %2322 = vmatprep.subr.bf16.mxu0 0
      %2323 = vmatpush1.bf16.msra.mxu0 0
      %2324 = vmatprep.subr.bf16.mxu0 0
      %2325 = vmatpush1.bf16.msra.mxu0 0
      %2326 = vmatprep.subr.bf16.mxu0 0
      %2327 = vmatpush1.bf16.msra.mxu0 0
      %2328 = vmatprep.mubr.bf16.mxu0 0
      %2329 = vmatmul.mubr.bf16.gmra.mrb[0].mxu0 %v2294
      %v2330 = vpop.f32.mrb[0].mxu0
      %v2331 = vadd.f32 %v2291, %v2330
      %v2332 = vpop.f32.mrb[0].mxu0
      %v2333 = vadd.f32 %v2291, %v2332
      %v2334 = vpop.f32.mrb[0].mxu0
      %v2335 = vpop.f32.mrb[0].mxu0
      %2336 = vdwg.mxu0
      %v2337 = vld [vmem:[%s61] sm:$0xf]
      %v2338 = vld [vmem:[%s63] sm:$0xff]
      %2340 = vset.pattern.permute.xlu0 0
      %2341 = vperm.xlu0 %2340, %v2338
      %v2342 = vpop.permute.xlu0 %2341
      %v2345 = vsel %vm1540, %v2337, 0
      %2347 = vmatprep.subr.bf16.mxu0 %v2285
      %2348 = vmatpush1.bf16.msra.mxu0 %v2284
      %2349 = vmatprep.subr.bf16.mxu0 0
      %2350 = vmatpush1.bf16.msra.mxu0 0
      %2351 = vmatprep.subr.bf16.mxu0 0
      %2352 = vmatpush1.bf16.msra.mxu0 0
      %2353 = vmatprep.subr.bf16.mxu0 0
      %2354 = vmatpush1.bf16.msra.mxu0 0
      %2355 = vmatprep.subr.bf16.mxu0 0
      %2356 = vmatpush1.bf16.msra.mxu0 0
      %2357 = vmatprep.subr.bf16.mxu0 0
      %2358 = vmatpush1.bf16.msra.mxu0 0
      %2359 = vmatprep.subr.bf16.mxu0 0
      %2360 = vmatpush1.bf16.msra.mxu0 0
      %2361 = vmatprep.subr.bf16.mxu0 0
      %2362 = vmatpush1.bf16.msra.mxu0 0
      %2363 = vmatprep.subr.bf16.mxu0 0
      %2364 = vmatpush1.bf16.msra.mxu0 0
      %2365 = vmatprep.subr.bf16.mxu0 0
      %2366 = vmatpush1.bf16.msra.mxu0 0
      %2367 = vmatprep.subr.bf16.mxu0 0
      %2368 = vmatpush1.bf16.msra.mxu0 0
      %2369 = vmatprep.subr.bf16.mxu0 0
      %2370 = vmatpush1.bf16.msra.mxu0 0
      %2371 = vmatprep.subr.bf16.mxu0 0
      %2372 = vmatpush1.bf16.msra.mxu0 0
      %2373 = vmatprep.subr.bf16.mxu0 0
      %2374 = vmatpush1.bf16.msra.mxu0 0
      %2375 = vmatprep.subr.bf16.mxu0 0
      %2376 = vmatpush1.bf16.msra.mxu0 0
      %2377 = vmatprep.subr.bf16.mxu0 0
      %2378 = vmatpush1.bf16.msra.mxu0 0
      %2379 = vmatprep.mubr.bf16.mxu0 0
      %2380 = vmatmul.mubr.bf16.gmra.mrb[0].mxu0 %v2345
      %v2381 = vpop.f32.mrb[0].mxu0
      %v2382 = vadd.f32 %v2342, %v2381
      %v2383 = vpop.f32.mrb[0].mxu0
      %v2384 = vadd.f32 %v2342, %v2383
      %v2385 = vpop.f32.mrb[0].mxu0
      %v2386 = vpop.f32.mrb[0].mxu0
      %2387 = vdwg.mxu0
      %v2388 = vmax.f32 %v2382, 0.0
      %v2389 = vmax.f32 %v2384, 0.0
      %v2390 = vld [vmem:[%s65] sm:$0x1]
      %v2391 = vpack.c.bf16 %v2388, %v2388
      %v2392 = vpack.c.bf16 %v2389, %v2389
      %v2393 = vld [vmem:[#allocation2] sm:$0x1]
      %2395 = vset.pattern.permute.xlu0 0
      %2396 = vperm.xlu0 %2395, %v2393
      %v2397 = vpop.permute.xlu0 %2396
      %v2399 = vlaneseq
      %v2400 = vshrl.u32 %v2399, 7
      %v2401 = vsub.s32 0, %v2400
      %v2402 = vrot.slane %v2397, %v2401
      %v2404 = vsel %vm1315, %v2390, 0
      %v2407 = vsel %vm1319, %v2391, 0
      %v2410 = vsel %vm1319, %v2392, 0
      %2412 = vmatprep.subr.bf16.mxu0 %v2410
      %2413 = vmatpush1.bf16.msra.mxu0 %v2407
      %2414 = vmatprep.subr.bf16.mxu0 0
      %2415 = vmatpush1.bf16.msra.mxu0 0
      %2416 = vmatprep.subr.bf16.mxu0 0
      %2417 = vmatpush1.bf16.msra.mxu0 0
      %2418 = vmatprep.subr.bf16.mxu0 0
      %2419 = vmatpush1.bf16.msra.mxu0 0
      %2420 = vmatprep.subr.bf16.mxu0 0
      %2421 = vmatpush1.bf16.msra.mxu0 0
      %2422 = vmatprep.subr.bf16.mxu0 0
      %2423 = vmatpush1.bf16.msra.mxu0 0
      %2424 = vmatprep.subr.bf16.mxu0 0
      %2425 = vmatpush1.bf16.msra.mxu0 0
      %2426 = vmatprep.subr.bf16.mxu0 0
      %2427 = vmatpush1.bf16.msra.mxu0 0
      %2428 = vmatprep.subr.bf16.mxu0 0
      %2429 = vmatpush1.bf16.msra.mxu0 0
      %2430 = vmatprep.subr.bf16.mxu0 0
      %2431 = vmatpush1.bf16.msra.mxu0 0
      %2432 = vmatprep.subr.bf16.mxu0 0
      %2433 = vmatpush1.bf16.msra.mxu0 0
      %2434 = vmatprep.subr.bf16.mxu0 0
      %2435 = vmatpush1.bf16.msra.mxu0 0
      %2436 = vmatprep.subr.bf16.mxu0 0
      %2437 = vmatpush1.bf16.msra.mxu0 0
      %2438 = vmatprep.subr.bf16.mxu0 0
      %2439 = vmatpush1.bf16.msra.mxu0 0
      %2440 = vmatprep.subr.bf16.mxu0 0
      %2441 = vmatpush1.bf16.msra.mxu0 0
      %2442 = vmatprep.subr.bf16.mxu0 0
      %2443 = vmatpush1.bf16.msra.mxu0 0
      %2444 = vmatprep.mubr.bf16.mxu0 0
      %2445 = vmatmul.mubr.bf16.gmra.mrb[0].mxu0 %v2404
      %v2446 = vpop.f32.mrb[0].mxu0
      %v2447 = vadd.f32 %v2402, %v2446
      %v2448 = vpop.f32.mrb[0].mxu0
      %v2449 = vadd.f32 %v2402, %v2448
      %v2450 = vpop.f32.mrb[0].mxu0
      %v2451 = vpop.f32.mrb[0].mxu0
      %2452 = vdwg.mxu0
      %v2455 = vrot.slane %v2447, 6
      %v2456 = vrot.slane %v2449, 6
      %v2459 = vsel %vm1254, %v2331, %v2455
      %v2460 = vsel %vm1254, %v2333, %v2456
      %v2463 = vcombine.low %v2459, %v2460
      %2465 = vst [vmem:[%s1225] sm:$0x77] %v2463
      %p2466 = scmp.eq.s32.totalorder %s90, 0
      // Predicated region
      $region157: #{_lambda_.1} parent=155 // pred_check
        %p2467 = pneg %p2466
      $region158: #{_lambda_.1} parent=155 // pred_check_branch
        %2469 = sbr.rel (%p2467) target = $region160
      $region159: #{_lambda_.1} parent=155 // pred_region
        %vm2470 = vcmask 7168
        %2471 = vst.msk [vmem:[%s1230] sm:$0xff] %vm2470, 0.0
      $region160: #{_lambda_.1} parent=155 // pred_fallthru
        _
      %v2472 = vld [vmem:[%s1230] sm:$0xff]
      %v2473 = vadd.f32 %v2282, %v2283
      %2474 = vadd.xlane.f32.xlu0 %v2473
      %v2475 = vpop.xlane.xlu0 %2474
      %v2476 = vadd.f32 %v2472, %v2475
      %vm2477 = vcmask 7168
      %2478 = vst.msk [vmem:[%s1230] sm:$0xff] %vm2477, %v2476
      %s2479 = smul.u32 2, %s90
      %p2480 = scmp.lt.s32.totalorder %s89, 1
      %s2481 = scalar_select %p2480, %s89, 1
      %p2482 = scmp.lt.s32.totalorder %s2479, 1
      %s2483 = scalar_select %p2482, %s2479, 1
      %s2484 = smul.addr %s2481, 2
      %s2485 = sadd.s32 %s2483, %s2484
      %s2486 = smul.addr %s2485, 4
      %s2487 = scalar_lea.vmem %s69, %s2486
      %p2488 = scmp.lt.s32.totalorder %s89, 1
      %s2489 = scalar_select %p2488, %s89, 1
      %s2490 = smul.addr %s2489, 8
      %s2491 = scalar_lea.vmem %s71, %s2490
      // Predicated region
      $region161: #{_lambda_.1} parent=155 // pred_check
        %p2492 = pneg %p859
      $region162: #{_lambda_.1} parent=155 // pred_check_branch
        %2494 = sbr.rel (%p2492) target = $region164
      $region163: #{_lambda_.1} parent=155 // pred_region
        %s2495 = smul.u32 2, %s90
      $region164: #{_lambda_.1} parent=155 // pred_fallthru
        _
      // Predicated region
      $region165: #{_lambda_.1} parent=155 // pred_check
        %p2496 = pneg %p885
      $region166: #{_lambda_.1} parent=155 // pred_check_branch
        %2498 = sbr.rel (%p2496) target = $region168
      $region167: #{_lambda_.1} parent=155 // pred_region
        _
      $region168: #{_lambda_.1} parent=155 // pred_fallthru
        _
    $region156: #{_lambda_.1} parent=5 // pred_fallthru
      _
    %p2499 = scmp.le.s32.totalorder 2, %s80
    // Predicated region
    $region169: #{_lambda_.1} parent=5 // pred_check
      %p2500 = pneg %p2499
    $region170: #{_lambda_.1} parent=5 // pred_check_branch
      %2502 = sbr.rel (%p2500) target = $region172
    $region171: #{_lambda_.1} parent=5 // pred_region
      %s2503 = ssub.s32 %s80, 2
      // Predicated region
      $region173: #{_lambda_.1} parent=171 // pred_check
        %p2504 = pneg %p865
      $region174: #{_lambda_.1} parent=171 // pred_check_branch
        %2506 = sbr.rel (%p2504) target = $region176
      $region175: #{_lambda_.1} parent=171 // pred_region
        %s2507 = smul.u32 2, %s92
        %p2508 = scmp.lt.s32.totalorder %s91, 1
        %s2509 = scalar_select %p2508, %s91, 1
        %p2510 = scmp.lt.s32.totalorder %s2507, 1
        %s2511 = scalar_select %p2510, %s2507, 1
        %s2512 = smul.addr %s2509, 2
        %s2513 = sadd.s32 %s2511, %s2512
        %s2514 = smul.addr %s2513, 4
        %s2515 = scalar_lea.vmem %s69, %s2514
      $region176: #{_lambda_.1} parent=171 // pred_fallthru
        _
      // Predicated region
      $region177: #{_lambda_.1} parent=171 // pred_check
        %p2516 = pneg %p891
      $region178: #{_lambda_.1} parent=171 // pred_check_branch
        %2518 = sbr.rel (%p2516) target = $region180
      $region179: #{_lambda_.1} parent=171 // pred_region
        %p2519 = scmp.lt.s32.totalorder %s91, 1
        %s2520 = scalar_select %p2519, %s91, 1
        %s2521 = smul.addr %s2520, 8
        %s2522 = scalar_lea.vmem %s71, %s2521
      $region180: #{_lambda_.1} parent=171 // pred_fallthru
        _
    $region172: #{_lambda_.1} parent=5 // pred_fallthru
      _
  $region6: #{_lambda_.1} parent=0 // loop_footer
    %s84 = sadd.s32 1, %s80
  $region7: #{_lambda_.1} parent=0 // loop_footer_branch
    %79 = sbr.rel target = $region3
  $region8: #{_lambda_.1} parent=0 // loop_exit
    _

</llo_original>
